<compile_context>
chip_gen: v5e
topology: v5e:2x2
jax: 0.10.0
libtpu: 0.0.40
codegen_flags: <defaults>
</compile_context>

<pallas_src>
import jax
import jax.numpy as jnp
from jax.experimental import pallas as pl
from jax.experimental.pallas import tpu as pltpu

H = W = 16                    # spatial size implied by the fc head (32 * 2 * 2)
C_IN, C1, C2 = 12, 16, 32
FC1_OUT = 32


# ---------------------------------------------------------------------------
# Fused kernel
# ---------------------------------------------------------------------------
def _conv_rows(xp_ref, m_ref, b_ref, n, cout):
    """3x3 'same' conv + bias + ReLU in the rows layout.

    xp_ref : (n, H+2, W*cin) VMEM — vertically zero-padded activation rows
    m_ref  : (3, W*cin, W*cout)   — per-ky block-banded weight matrices
                                    (horizontal padding already folded in)
    b_ref  : (1, W*cout)          — bias tiled per output position
    returns (n, H, W*cout) float32, ReLU'd
    """
    wcin = xp_ref.shape[-1]
    acc = jnp.dot(xp_ref[:, 0:H, :].reshape(n * H, wcin), m_ref[0],
                  preferred_element_type=jnp.float32)
    acc += jnp.dot(xp_ref[:, 1:H + 1, :].reshape(n * H, wcin), m_ref[1],
                   preferred_element_type=jnp.float32)
    acc += jnp.dot(xp_ref[:, 2:H + 2, :].reshape(n * H, wcin), m_ref[2],
                   preferred_element_type=jnp.float32)
    y = jnp.maximum(acc + b_ref[...], 0.0)
    return y.reshape(n, H, W * cout)


def fused_cnn_kernel(x_ref, m1_ref, b1_ref, m2_ref, b2_ref,
                     pfc1_ref, fc1b_ref, fc2w_ref, fc2b_ref, o_ref,
                     xp1_ref, xp2_ref):
    n = x_ref.shape[0]

    # ---- conv1 + relu ------------------------------------------------------
    zrow1 = jnp.zeros((n, 1, W * C_IN), jnp.float32)
    xp1_ref[:, 0:1, :] = zrow1
    xp1_ref[:, H + 1:H + 2, :] = zrow1
    xp1_ref[:, 1:H + 1, :] = x_ref[...]
    y1 = _conv_rows(xp1_ref, m1_ref, b1_ref, n, C1)        # (n, H, W*C1)

    # ---- conv2 + relu ------------------------------------------------------
    zrow2 = jnp.zeros((n, 1, W * C1), jnp.float32)
    xp2_ref[:, 0:1, :] = zrow2
    xp2_ref[:, H + 1:H + 2, :] = zrow2
    xp2_ref[:, 1:H + 1, :] = y1
    y2 = _conv_rows(xp2_ref, m2_ref, b2_ref, n, C2)        # (n, H, W*C2)

    # ---- adaptive avg-pool(2,2) fused into fc1 ------------------------------
    # Sublane-sum the 8 rows of each h-bin, then one matmul per bin whose
    # matrix already holds the w-binning, the 1/64 mean and PyTorch's (c,i,j)
    # flatten permutation.
    hs0 = jnp.sum(y2[:, 0:H // 2, :], axis=1)              # (n, W*C2)
    hs1 = jnp.sum(y2[:, H // 2:H, :], axis=1)              # (n, W*C2)
    h = (jnp.dot(hs0, pfc1_ref[0], preferred_element_type=jnp.float32)
         + jnp.dot(hs1, pfc1_ref[1], preferred_element_type=jnp.float32)
         + fc1b_ref[...])
    h = jnp.maximum(h, 0.0)
    # TODO(synk): nn.Dropout(0.3) is identity at inference; train-mode masking not implemented.
    o_ref[...] = (jnp.dot(h, fc2w_ref[...], preferred_element_type=jnp.float32)
                  + fc2b_ref[...])


# ---------------------------------------------------------------------------
# One-time parameter repacking (hoisted out of the per-forward path)
# ---------------------------------------------------------------------------
def _banded_row_conv_matrices(wt):
    """OIHW (cout, cin, 3, 3) -> (3, W*cin, W*cout) block-banded row matrices.

    M[ky][w_in*cin + c, w_out*cout + o] = wt[o, c, ky, w_in - w_out + 1],
    zero where the horizontal tap falls outside [0, 3) (W-padding folded in).
    """
    cout, cin = wt.shape[0], wt.shape[1]
    w_in = jnp.arange(W)[:, None]
    w_out = jnp.arange(W)[None, :]
    kx = w_in - w_out + 1
    valid = (kx >= 0) & (kx <= 2)
    kx_c = jnp.clip(kx, 0, 2)
    mats = []
    for ky in range(3):
        t = wt[:, :, ky, :][:, :, kx_c]                    # (cout, cin, W, W)
        t = jnp.where(valid[None, None, :, :], t, 0.0)
        mats.append(jnp.transpose(t, (2, 1, 3, 0)).reshape(W * cin, W * cout))
    return jnp.stack(mats, axis=0).astype(jnp.float32)


def _pool_fc1_matrices(fc1_w):
    """fc1 weight (FC1_OUT, 4*C2) -> (2, W*C2, FC1_OUT).

    B[i][w*C2 + c, o] = fc1_w[o, c*4 + i*2 + (w // 8)] / 64, i.e. the 2x2
    adaptive-avg-pool's w-binning, the 1/64 mean and PyTorch's (c,i,j)
    flatten order are all folded into fc1.
    """
    fc1 = fc1_w.reshape(FC1_OUT, C2, 2, 2)                 # (o, c, i, j)
    j_of_w = jnp.arange(W) // (W // 2)                     # (W,)
    b = fc1[:, :, :, j_of_w]                               # (o, c, i, w)
    b = jnp.transpose(b, (2, 3, 1, 0)) / 64.0              # (i, w, c, o)
    return b.reshape(2, W * C2, FC1_OUT).astype(jnp.float32)


def prepare_params(params):
    """Repack PyTorch-convention weights into the kernel layout. Call once."""
    f32 = jnp.float32
    return {
        "m1": _banded_row_conv_matrices(params["conv1_w"].astype(f32)),
        "b1": jnp.tile(params["conv1_b"].reshape(1, C1).astype(f32), (1, W)),
        "m2": _banded_row_conv_matrices(params["conv2_w"].astype(f32)),
        "b2": jnp.tile(params["conv2_b"].reshape(1, C2).astype(f32), (1, W)),
        "pfc1": _pool_fc1_matrices(params["fc1_w"].astype(f32)),
        "fc1b": params["fc1_b"].reshape(1, FC1_OUT).astype(f32),
        "fc2w": jnp.transpose(params["fc2_w"], (1, 0)).astype(f32),
        "fc2b": params["fc2_b"].reshape(1, 1).astype(f32),
    }


# ---------------------------------------------------------------------------
# Forward wrapper: one fused pallas_call, all intermediates in VMEM
# ---------------------------------------------------------------------------
def cnn_model_forward(x_nchw, prepped):
    """Fused forward pass. x_nchw: (N, 12, 16, 16) PyTorch-layout input."""
    n = x_nchw.shape[0]
    # NCHW -> rows layout (N, H, W*C): per row, channels fastest within each w.
    x = jnp.transpose(x_nchw, (0, 2, 3, 1)).reshape(n, H, W * C_IN).astype(jnp.float32)
    vmem = pl.BlockSpec(memory_space=pltpu.MemorySpace.VMEM)
    return pl.pallas_call(
        fused_cnn_kernel,
        out_shape=jax.ShapeDtypeStruct((n, 1), jnp.float32),
        in_specs=[vmem] * 9,
        out_specs=vmem,
        scratch_shapes=[
            pltpu.VMEM((n, H + 2, W * C_IN), jnp.float32),   # xp1: v-padded input rows
            pltpu.VMEM((n, H + 2, W * C1), jnp.float32),     # xp2: v-padded conv1 rows
        ],
    )(x, prepped["m1"], prepped["b1"], prepped["m2"], prepped["b2"],
      prepped["pfc1"], prepped["fc1b"], prepped["fc2w"], prepped["fc2b"])


# ---------------------------------------------------------------------------
# Pure-JAX reference (PyTorch semantics) for a correctness check
# ---------------------------------------------------------------------------
def _reference_forward(x_nchw, params):
    hp = jax.lax.Precision.HIGHEST
    dn = ("NHWC", "HWIO", "NHWC")
    x = jnp.transpose(x_nchw, (0, 2, 3, 1)).astype(jnp.float32)
    w1 = jnp.transpose(params["conv1_w"], (2, 3, 1, 0))
    y = jax.lax.conv_general_dilated(x, w1, (1, 1), "SAME",
                                     dimension_numbers=dn, precision=hp)
    y = jnp.maximum(y + params["conv1_b"], 0.0)
    w2 = jnp.transpose(params["conv2_w"], (2, 3, 1, 0))
    y = jax.lax.conv_general_dilated(y, w2, (1, 1), "SAME",
                                     dimension_numbers=dn, precision=hp)
    y = jnp.maximum(y + params["conv2_b"], 0.0)
    n, _, _, c = y.shape
    pooled = y.reshape(n, 2, H // 2, 2, W // 2, c).mean(axis=(2, 4))   # (n, 2, 2, c)
    flat = jnp.transpose(pooled, (0, 3, 1, 2)).reshape(n, -1)          # PyTorch (c, i, j)
    h = jnp.maximum(jnp.dot(flat, params["fc1_w"].T, precision=hp)
                    + params["fc1_b"], 0.0)
    return jnp.dot(h, params["fc2_w"].T, precision=hp) + params["fc2_b"]


# ---------------------------------------------------------------------------
if __name__ == "__main__":
    key = jax.random.PRNGKey(0)
    ks = jax.random.split(key, 9)

    # Deterministic synthetic parameters, PyTorch-convention shapes.
    params = {
        "conv1_w": 0.1 * jax.random.normal(ks[0], (C1, C_IN, 3, 3), jnp.float32),
        "conv1_b": 0.1 * jax.random.normal(ks[1], (C1,), jnp.float32),
        "conv2_w": 0.1 * jax.random.normal(ks[2], (C2, C1, 3, 3), jnp.float32),
        "conv2_b": 0.1 * jax.random.normal(ks[3], (C2,), jnp.float32),
        "fc1_w":   0.1 * jax.random.normal(ks[4], (FC1_OUT, 4 * C2), jnp.float32),
        "fc1_b":   0.1 * jax.random.normal(ks[5], (FC1_OUT,), jnp.float32),
        "fc2_w":   0.1 * jax.random.normal(ks[6], (1, FC1_OUT), jnp.float32),
        "fc2_b":   0.1 * jax.random.normal(ks[7], (1,), jnp.float32),
    }

    # Input: NCHW with 12 channels (required by conv1), 16x16 spatial.
    x = jax.random.normal(ks[8], (2, C_IN, H, W), jnp.float32)

    prepped = prepare_params(params)          # one-time weight repack (outside jit)
    fwd = jax.jit(cnn_model_forward)
    out = jax.block_until_ready(fwd(x, prepped))
    assert out.shape == (2, 1) and out.dtype == jnp.float32

    ref = jax.block_until_ready(_reference_forward(x, params))
    max_err = float(jnp.max(jnp.abs(out - ref)))
    assert max_err < 5e-2, f"kernel/reference mismatch: max abs err {max_err}"

    print("KERNEL_OK")
</pallas_src>

<mosaic_0001>
module attributes {stable_mosaic.version = 11 : i64} {
  func.func @fused_cnn_kernel(%arg0: memref<2x16x192xf32, #tpu.memory_space<vmem>>, %arg1: memref<3x192x256xf32, #tpu.memory_space<vmem>>, %arg2: memref<1x256xf32, #tpu.memory_space<vmem>>, %arg3: memref<3x256x512xf32, #tpu.memory_space<vmem>>, %arg4: memref<1x512xf32, #tpu.memory_space<vmem>>, %arg5: memref<2x512x32xf32, #tpu.memory_space<vmem>>, %arg6: memref<1x32xf32, #tpu.memory_space<vmem>>, %arg7: memref<32x1xf32, #tpu.memory_space<vmem>>, %arg8: memref<1x1xf32, #tpu.memory_space<vmem>>, %arg9: memref<2x1xf32, #tpu.memory_space<vmem>>, %arg10: memref<2x18x192xf32, #tpu.memory_space<vmem>>, %arg11: memref<2x18x256xf32, #tpu.memory_space<vmem>>) attributes {dimension_semantics = [], scalar_prefetch = 0 : i64, scratch_operands = 2 : i64, tpu.core_type = #tpu.core_type<tc>} {
    %cst = arith.constant 0.000000e+00 : f32
    %0 = vector.broadcast %cst : f32 to vector<2x1x192xf32>
    %c0 = arith.constant 0 : index
    %c0_0 = arith.constant 0 : index
    %c0_1 = arith.constant 0 : index
    %1 = vector.load %arg10[%c0, %c0_0, %c0_1] : memref<2x18x192xf32, #tpu.memory_space<vmem>>, vector<2x1x192xf32>
    tpu.vector_store %arg10[%c0, %c0_0, %c0_1], %0 {strides = array<i32>} : memref<2x18x192xf32, #tpu.memory_space<vmem>>, vector<2x1x192xf32>,
    %c0_2 = arith.constant 0 : index
    %c17 = arith.constant 17 : index
    %c0_3 = arith.constant 0 : index
    %2 = vector.load %arg10[%c0_2, %c17, %c0_3] : memref<2x18x192xf32, #tpu.memory_space<vmem>>, vector<2x1x192xf32>
    tpu.vector_store %arg10[%c0_2, %c17, %c0_3], %0 {strides = array<i32>} : memref<2x18x192xf32, #tpu.memory_space<vmem>>, vector<2x1x192xf32>,
    %c0_4 = arith.constant 0 : index
    %c0_5 = arith.constant 0 : index
    %c0_6 = arith.constant 0 : index
    %3 = vector.load %arg0[%c0_4, %c0_5, %c0_6] : memref<2x16x192xf32, #tpu.memory_space<vmem>>, vector<2x16x192xf32>
    %c0_7 = arith.constant 0 : index
    %c1 = arith.constant 1 : index
    %c0_8 = arith.constant 0 : index
    %4 = vector.load %arg10[%c0_7, %c1, %c0_8] : memref<2x18x192xf32, #tpu.memory_space<vmem>>, vector<2x16x192xf32>
    tpu.vector_store %arg10[%c0_7, %c1, %c0_8], %3 {strides = array<i32>} : memref<2x18x192xf32, #tpu.memory_space<vmem>>, vector<2x16x192xf32>,
    %c0_9 = arith.constant 0 : index
    %c0_10 = arith.constant 0 : index
    %c0_11 = arith.constant 0 : index
    %5 = vector.load %arg10[%c0_9, %c0_10, %c0_11] : memref<2x18x192xf32, #tpu.memory_space<vmem>>, vector<2x16x192xf32>
    %6 = vector.shape_cast %5 : vector<2x16x192xf32> to vector<32x192xf32>
    %c0_12 = arith.constant 0 : index
    %c0_13 = arith.constant 0 : index
    %c0_14 = arith.constant 0 : index
    %7 = vector.load %arg1[%c0_12, %c0_13, %c0_14] : memref<3x192x256xf32, #tpu.memory_space<vmem>>, vector<1x192x256xf32>
    %8 = vector.shape_cast %7 : vector<1x192x256xf32> to vector<192x256xf32>
    %cst_15 = arith.constant dense<0.000000e+00> : vector<32x256xf32>
    %9 = tpu.matmul %6, %8, %cst_15 {dimension_numbers = #tpu.dot_dimension_numbers<[1], [0], [0], [1], [0, 0, 1, 1], [], []>} : vector<32x192xf32>, vector<192x256xf32>, vector<32x256xf32> -> vector<32x256xf32>
    %c0_16 = arith.constant 0 : index
    %c1_17 = arith.constant 1 : index
    %c0_18 = arith.constant 0 : index
    %10 = vector.load %arg10[%c0_16, %c1_17, %c0_18] : memref<2x18x192xf32, #tpu.memory_space<vmem>>, vector<2x16x192xf32>
    %11 = vector.shape_cast %10 : vector<2x16x192xf32> to vector<32x192xf32>
    %c1_19 = arith.constant 1 : index
    %c0_20 = arith.constant 0 : index
    %c0_21 = arith.constant 0 : index
    %12 = vector.load %arg1[%c1_19, %c0_20, %c0_21] : memref<3x192x256xf32, #tpu.memory_space<vmem>>, vector<1x192x256xf32>
    %13 = vector.shape_cast %12 : vector<1x192x256xf32> to vector<192x256xf32>
    %cst_22 = arith.constant dense<0.000000e+00> : vector<32x256xf32>
    %14 = tpu.matmul %11, %13, %cst_22 {dimension_numbers = #tpu.dot_dimension_numbers<[1], [0], [0], [1], [0, 0, 1, 1], [], []>} : vector<32x192xf32>, vector<192x256xf32>, vector<32x256xf32> -> vector<32x256xf32>
    %15 = arith.addf %9, %14 : vector<32x256xf32>
    %c0_23 = arith.constant 0 : index
    %c2 = arith.constant 2 : index
    %c0_24 = arith.constant 0 : index
    %16 = vector.load %arg10[%c0_23, %c2, %c0_24] : memref<2x18x192xf32, #tpu.memory_space<vmem>>, vector<2x16x192xf32>
    %17 = vector.shape_cast %16 : vector<2x16x192xf32> to vector<32x192xf32>
    %c2_25 = arith.constant 2 : index
    %c0_26 = arith.constant 0 : index
    %c0_27 = arith.constant 0 : index
    %18 = vector.load %arg1[%c2_25, %c0_26, %c0_27] : memref<3x192x256xf32, #tpu.memory_space<vmem>>, vector<1x192x256xf32>
    %19 = vector.shape_cast %18 : vector<1x192x256xf32> to vector<192x256xf32>
    %cst_28 = arith.constant dense<0.000000e+00> : vector<32x256xf32>
    %20 = tpu.matmul %17, %19, %cst_28 {dimension_numbers = #tpu.dot_dimension_numbers<[1], [0], [0], [1], [0, 0, 1, 1], [], []>} : vector<32x192xf32>, vector<192x256xf32>, vector<32x256xf32> -> vector<32x256xf32>
    %21 = arith.addf %15, %20 : vector<32x256xf32>
    %c0_29 = arith.constant 0 : index
    %c0_30 = arith.constant 0 : index
    %22 = vector.load %arg2[%c0_29, %c0_30] : memref<1x256xf32, #tpu.memory_space<vmem>>, vector<1x256xf32>
    %23 = vector.broadcast %22 : vector<1x256xf32> to vector<32x256xf32>
    %24 = arith.addf %21, %23 : vector<32x256xf32>
    %cst_31 = arith.constant 0.000000e+00 : f32
    %25 = vector.broadcast %cst_31 : f32 to vector<32x256xf32>
    %26 = arith.maximumf %24, %25 : vector<32x256xf32>
    %27 = vector.shape_cast %26 : vector<32x256xf32> to vector<2x16x256xf32>
    %cst_32 = arith.constant 0.000000e+00 : f32
    %28 = vector.broadcast %cst_32 : f32 to vector<2x1x256xf32>
    %c0_33 = arith.constant 0 : index
    %c0_34 = arith.constant 0 : index
    %c0_35 = arith.constant 0 : index
    %29 = vector.load %arg11[%c0_33, %c0_34, %c0_35] : memref<2x18x256xf32, #tpu.memory_space<vmem>>, vector<2x1x256xf32>
    tpu.vector_store %arg11[%c0_33, %c0_34, %c0_35], %28 {strides = array<i32>} : memref<2x18x256xf32, #tpu.memory_space<vmem>>, vector<2x1x256xf32>,
    %c0_36 = arith.constant 0 : index
    %c17_37 = arith.constant 17 : index
    %c0_38 = arith.constant 0 : index
    %30 = vector.load %arg11[%c0_36, %c17_37, %c0_38] : memref<2x18x256xf32, #tpu.memory_space<vmem>>, vector<2x1x256xf32>
    tpu.vector_store %arg11[%c0_36, %c17_37, %c0_38], %28 {strides = array<i32>} : memref<2x18x256xf32, #tpu.memory_space<vmem>>, vector<2x1x256xf32>,
    %c0_39 = arith.constant 0 : index
    %c1_40 = arith.constant 1 : index
    %c0_41 = arith.constant 0 : index
    %31 = vector.load %arg11[%c0_39, %c1_40, %c0_41] : memref<2x18x256xf32, #tpu.memory_space<vmem>>, vector<2x16x256xf32>
    tpu.vector_store %arg11[%c0_39, %c1_40, %c0_41], %27 {strides = array<i32>} : memref<2x18x256xf32, #tpu.memory_space<vmem>>, vector<2x16x256xf32>,
    %c0_42 = arith.constant 0 : index
    %c0_43 = arith.constant 0 : index
    %c0_44 = arith.constant 0 : index
    %32 = vector.load %arg11[%c0_42, %c0_43, %c0_44] : memref<2x18x256xf32, #tpu.memory_space<vmem>>, vector<2x16x256xf32>
    %33 = vector.shape_cast %32 : vector<2x16x256xf32> to vector<32x256xf32>
    %c0_45 = arith.constant 0 : index
    %c0_46 = arith.constant 0 : index
    %c0_47 = arith.constant 0 : index
    %34 = vector.load %arg3[%c0_45, %c0_46, %c0_47] : memref<3x256x512xf32, #tpu.memory_space<vmem>>, vector<1x256x512xf32>
    %35 = vector.shape_cast %34 : vector<1x256x512xf32> to vector<256x512xf32>
    %cst_48 = arith.constant dense<0.000000e+00> : vector<32x512xf32>
    %36 = tpu.matmul %33, %35, %cst_48 {dimension_numbers = #tpu.dot_dimension_numbers<[1], [0], [0], [1], [0, 0, 1, 1], [], []>} : vector<32x256xf32>, vector<256x512xf32>, vector<32x512xf32> -> vector<32x512xf32>
    %c0_49 = arith.constant 0 : index
    %c1_50 = arith.constant 1 : index
    %c0_51 = arith.constant 0 : index
    %37 = vector.load %arg11[%c0_49, %c1_50, %c0_51] : memref<2x18x256xf32, #tpu.memory_space<vmem>>, vector<2x16x256xf32>
    %38 = vector.shape_cast %37 : vector<2x16x256xf32> to vector<32x256xf32>
    %c1_52 = arith.constant 1 : index
    %c0_53 = arith.constant 0 : index
    %c0_54 = arith.constant 0 : index
    %39 = vector.load %arg3[%c1_52, %c0_53, %c0_54] : memref<3x256x512xf32, #tpu.memory_space<vmem>>, vector<1x256x512xf32>
    %40 = vector.shape_cast %39 : vector<1x256x512xf32> to vector<256x512xf32>
    %cst_55 = arith.constant dense<0.000000e+00> : vector<32x512xf32>
    %41 = tpu.matmul %38, %40, %cst_55 {dimension_numbers = #tpu.dot_dimension_numbers<[1], [0], [0], [1], [0, 0, 1, 1], [], []>} : vector<32x256xf32>, vector<256x512xf32>, vector<32x512xf32> -> vector<32x512xf32>
    %42 = arith.addf %36, %41 : vector<32x512xf32>
    %c0_56 = arith.constant 0 : index
    %c2_57 = arith.constant 2 : index
    %c0_58 = arith.constant 0 : index
    %43 = vector.load %arg11[%c0_56, %c2_57, %c0_58] : memref<2x18x256xf32, #tpu.memory_space<vmem>>, vector<2x16x256xf32>
    %44 = vector.shape_cast %43 : vector<2x16x256xf32> to vector<32x256xf32>
    %c2_59 = arith.constant 2 : index
    %c0_60 = arith.constant 0 : index
    %c0_61 = arith.constant 0 : index
    %45 = vector.load %arg3[%c2_59, %c0_60, %c0_61] : memref<3x256x512xf32, #tpu.memory_space<vmem>>, vector<1x256x512xf32>
    %46 = vector.shape_cast %45 : vector<1x256x512xf32> to vector<256x512xf32>
    %cst_62 = arith.constant dense<0.000000e+00> : vector<32x512xf32>
    %47 = tpu.matmul %44, %46, %cst_62 {dimension_numbers = #tpu.dot_dimension_numbers<[1], [0], [0], [1], [0, 0, 1, 1], [], []>} : vector<32x256xf32>, vector<256x512xf32>, vector<32x512xf32> -> vector<32x512xf32>
    %48 = arith.addf %42, %47 : vector<32x512xf32>
    %c0_63 = arith.constant 0 : index
    %c0_64 = arith.constant 0 : index
    %49 = vector.load %arg4[%c0_63, %c0_64] : memref<1x512xf32, #tpu.memory_space<vmem>>, vector<1x512xf32>
    %50 = vector.broadcast %49 : vector<1x512xf32> to vector<32x512xf32>
    %51 = arith.addf %48, %50 : vector<32x512xf32>
    %cst_65 = arith.constant 0.000000e+00 : f32
    %52 = vector.broadcast %cst_65 : f32 to vector<32x512xf32>
    %53 = arith.maximumf %51, %52 : vector<32x512xf32>
    %54 = vector.shape_cast %53 : vector<32x512xf32> to vector<2x16x512xf32>
    %55 = vector.extract_strided_slice %54 {offsets = [0, 0, 0], sizes = [2, 8, 512], strides = [1, 1, 1]} : vector<2x16x512xf32> to vector<2x8x512xf32>
    %cst_66 = arith.constant dense<0.000000e+00> : vector<2x512xf32>
    %56 = vector.multi_reduction <add>, %55, %cst_66 [1] : vector<2x8x512xf32> to vector<2x512xf32>
    %57 = vector.extract_strided_slice %54 {offsets = [0, 8, 0], sizes = [2, 8, 512], strides = [1, 1, 1]} : vector<2x16x512xf32> to vector<2x8x512xf32>
    %cst_67 = arith.constant dense<0.000000e+00> : vector<2x512xf32>
    %58 = vector.multi_reduction <add>, %57, %cst_67 [1] : vector<2x8x512xf32> to vector<2x512xf32>
    %c0_68 = arith.constant 0 : index
    %c0_69 = arith.constant 0 : index
    %c0_70 = arith.constant 0 : index
    %59 = vector.load %arg5[%c0_68, %c0_69, %c0_70] : memref<2x512x32xf32, #tpu.memory_space<vmem>>, vector<1x512x32xf32>
    %60 = vector.shape_cast %59 : vector<1x512x32xf32> to vector<512x32xf32>
    %cst_71 = arith.constant dense<0.000000e+00> : vector<2x32xf32>
    %61 = tpu.matmul %56, %60, %cst_71 {dimension_numbers = #tpu.dot_dimension_numbers<[1], [0], [0], [1], [0, 0, 1, 1], [], []>} : vector<2x512xf32>, vector<512x32xf32>, vector<2x32xf32> -> vector<2x32xf32>
    %c1_72 = arith.constant 1 : index
    %c0_73 = arith.constant 0 : index
    %c0_74 = arith.constant 0 : index
    %62 = vector.load %arg5[%c1_72, %c0_73, %c0_74] : memref<2x512x32xf32, #tpu.memory_space<vmem>>, vector<1x512x32xf32>
    %63 = vector.shape_cast %62 : vector<1x512x32xf32> to vector<512x32xf32>
    %cst_75 = arith.constant dense<0.000000e+00> : vector<2x32xf32>
    %64 = tpu.matmul %58, %63, %cst_75 {dimension_numbers = #tpu.dot_dimension_numbers<[1], [0], [0], [1], [0, 0, 1, 1], [], []>} : vector<2x512xf32>, vector<512x32xf32>, vector<2x32xf32> -> vector<2x32xf32>
    %65 = arith.addf %61, %64 : vector<2x32xf32>
    %c0_76 = arith.constant 0 : index
    %c0_77 = arith.constant 0 : index
    %66 = vector.load %arg6[%c0_76, %c0_77] : memref<1x32xf32, #tpu.memory_space<vmem>>, vector<1x32xf32>
    %67 = vector.broadcast %66 : vector<1x32xf32> to vector<2x32xf32>
    %68 = arith.addf %65, %67 : vector<2x32xf32>
    %cst_78 = arith.constant 0.000000e+00 : f32
    %69 = vector.broadcast %cst_78 : f32 to vector<2x32xf32>
    %70 = arith.maximumf %68, %69 : vector<2x32xf32>
    %c0_79 = arith.constant 0 : index
    %c0_80 = arith.constant 0 : index
    %71 = vector.load %arg7[%c0_79, %c0_80] : memref<32x1xf32, #tpu.memory_space<vmem>>, vector<32x1xf32>
    %cst_81 = arith.constant dense<0.000000e+00> : vector<2x1xf32>
    %72 = tpu.matmul %70, %71, %cst_81 {dimension_numbers = #tpu.dot_dimension_numbers<[1], [0], [0], [1], [0, 0, 1, 1], [], []>} : vector<2x32xf32>, vector<32x1xf32>, vector<2x1xf32> -> vector<2x1xf32>
    %c0_82 = arith.constant 0 : index
    %c0_83 = arith.constant 0 : index
    %73 = vector.load %arg8[%c0_82, %c0_83] : memref<1x1xf32, #tpu.memory_space<vmem>>, vector<1x1xf32>
    %74 = vector.broadcast %73 : vector<1x1xf32> to vector<2x1xf32>
    %75 = arith.addf %72, %74 : vector<2x1xf32>
    %c0_84 = arith.constant 0 : index
    %c0_85 = arith.constant 0 : index
    %76 = vector.load %arg9[%c0_84, %c0_85] : memref<2x1xf32, #tpu.memory_space<vmem>>, vector<2x1xf32>
    tpu.vector_store %arg9[%c0_84, %c0_85], %75 {strides = array<i32>} : memref<2x1xf32, #tpu.memory_space<vmem>>, vector<2x1xf32>,
    return
  }
}

</mosaic_0001>

<llo_original>
// kernel: cnn_model_forward.1
$region0: #{cnn_model_forward.1}
  #allocation0 [shape = 'u32[]', space=smem, size = 0x4, offset = 0x4, fixed_abs, tag = 'smem constant byte address 0x4 - core index']
  #allocation1 [shape = 'u32[72,128]{1,0:T(1,128)}', space=vmem, size = 0x9000, scoped, tag = 'internal scratch']
  #allocation2 [shape = 'f32[2,18,192]{2,1,0:T(8,128)}', space=vmem, size = 0xc000, scoped, tag = 'scratch operand']
  #allocation3 [shape = 'f32[2,18,256]{2,1,0:T(8,128)}', space=vmem, size = 0xc000, scoped, tag = 'scratch operand']
  #allocation4 [shape = 'f32[1,1]{1,0:T(1,128)S(1)}', space=vmem, size = 0x200, scoped, tag = 'scoped memory for cnn_model_forward.1']
  %s0 = inlined_call_operand.vmem [shape: f32[2,16,192], index: 0, kind: input, shape index: {}]
  %s1 = inlined_call_operand.hbm [shape: f32[3,192,256], index: 1, kind: input, shape index: {}]
  %s2 = inlined_call_operand.hbm [shape: f32[1,256], index: 2, kind: input, shape index: {}]
  %s3 = inlined_call_operand.hbm [shape: f32[3,256,512], index: 3, kind: input, shape index: {}]
  %s4 = inlined_call_operand.hbm [shape: f32[1,512], index: 4, kind: input, shape index: {}]
  %s5 = inlined_call_operand.vmem [shape: f32[2,512,32], index: 5, kind: input, shape index: {}]
  %s6 = inlined_call_operand.hbm [shape: f32[1,32], index: 6, kind: input, shape index: {}]
  %s7 = inlined_call_operand.vmem [shape: f32[32,1], index: 7, kind: input, shape index: {}]
  %s8 = inlined_call_operand.<no memory space> [shape: f32[1,1], index: 8, kind: input, shape index: {}]
  %s9 = inlined_call_operand.vmem [shape: f32[2,1], index: 9, kind: output, shape index: {}]
  %s10 = sld [smem:[#allocation0]]
  $region66: #{cnn_model_forward.1} parent=0
    _
  %s12 = ssub.s32 1, %s10
  %s13 = scalar_select 0, %s12, %s10
  %v14 = vstv %s8
  %15 = vst [vmem:[#allocation4] sm:$0x1] %v14
  $region1: #{cnn_model_forward.1} parent=0
    #allocation5 [shape = 'u8[589824]{0}', space=vmem, size = 0x90000, scoped, tag = 'input window, operand 1, single buffered']
    #allocation6 [shape = 's32[1]{0}', space=sflag, size = 0x4, scoped, tag = 'scoped memory for cnn_model_forward.1']
    #allocation7 [shape = 'u8[1024]{0}', space=vmem, size = 0x400, scoped, tag = 'input window, operand 2, single buffered']
    #allocation8 [shape = 's32[1]{0}', space=sflag, size = 0x4, scoped, tag = 'scoped memory for cnn_model_forward.1']
    #allocation9 [shape = 'u8[1572864]{0}', space=vmem, size = 0x180000, scoped, tag = 'input window, operand 3, single buffered']
    #allocation10 [shape = 'u8[2048]{0}', space=vmem, size = 0x800, scoped, tag = 'input window, operand 4, single buffered']
    #allocation11 [shape = 's32[1]{0}', space=sflag, size = 0x4, scoped, tag = 'scoped memory for cnn_model_forward.1']
    #allocation12 [shape = 'u8[512]{0}', space=vmem, size = 0x400, scoped, tag = 'input window, operand 6, single buffered']
    %16 = vsyncpa [#allocation6], 0
    %17 = vsyncpa [#allocation8], 0
    %18 = vsyncpa [#allocation11], 0
    // Predicated region
    $region2: #{cnn_model_forward.1} parent=1 // pred_check
      _
    $region3: #{cnn_model_forward.1} parent=1 // pred_check_branch
      %20 = sbr.rel (0) target = $region5
    $region4: #{cnn_model_forward.1} parent=1 // pred_region
      _
    $region5: #{cnn_model_forward.1} parent=1 // pred_fallthru
      _
    // Predicated region
    $region6: #{cnn_model_forward.1} parent=1 // pred_check
      _
    $region7: #{cnn_model_forward.1} parent=1 // pred_check_branch
      %22 = sbr.rel (0) target = $region9
    $region8: #{cnn_model_forward.1} parent=1 // pred_region
      %24 = vsyncadd [#allocation6], 0
      %s25 = sshll.u32 %s1, 4
      %s26 = int_to_ptr.hbm [resolvable:$true] %s25
      %s27 = sshll.u32 [#allocation5], 4
      %s28 = int_to_ptr.vmem [resolvable:$true] %s27
      %33 = dma.hbm_to_vmem [thread:$0]  %s26, 18432, %s28, [#allocation6], 256, 256, 16
    $region9: #{cnn_model_forward.1} parent=1 // pred_fallthru
      _
    // Predicated region
    $region10: #{cnn_model_forward.1} parent=1 // pred_check
      _
    $region11: #{cnn_model_forward.1} parent=1 // pred_check_branch
      %35 = sbr.rel (0) target = $region13
    $region12: #{cnn_model_forward.1} parent=1 // pred_region
      %37 = vsyncadd [#allocation8], 0
      %s39 = sshll.u32 %s2, 4
      %s40 = int_to_ptr.hbm [resolvable:$true] %s39
      %s41 = sshll.u32 [#allocation7], 4
      %s42 = int_to_ptr.vmem [resolvable:$true] %s41
      %44 = dma.hbm_to_vmem [thread:$0]  %s40, 32, %s42, [#allocation8]
    $region13: #{cnn_model_forward.1} parent=1 // pred_fallthru
      _
    // Predicated region
    $region14: #{cnn_model_forward.1} parent=1 // pred_check
      _
    $region15: #{cnn_model_forward.1} parent=1 // pred_check_branch
      %46 = sbr.rel (0) target = $region17
    $region16: #{cnn_model_forward.1} parent=1 // pred_region
      %48 = vsyncadd [#allocation8], 0
      %s49 = sshll.u32 %s3, 4
      %s50 = int_to_ptr.hbm [resolvable:$true] %s49
      %s51 = sshll.u32 [#allocation9], 4
      %s52 = int_to_ptr.vmem [resolvable:$true] %s51
      %57 = dma.hbm_to_vmem [thread:$0]  %s50, 49152, %s52, [#allocation8], 512, 512, 32
    $region17: #{cnn_model_forward.1} parent=1 // pred_fallthru
      _
    // Predicated region
    $region18: #{cnn_model_forward.1} parent=1 // pred_check
      _
    $region19: #{cnn_model_forward.1} parent=1 // pred_check_branch
      %59 = sbr.rel (0) target = $region21
    $region20: #{cnn_model_forward.1} parent=1 // pred_region
      %61 = vsyncadd [#allocation11], 0
      %s63 = sshll.u32 %s4, 4
      %s64 = int_to_ptr.hbm [resolvable:$true] %s63
      %s65 = sshll.u32 [#allocation10], 4
      %s66 = int_to_ptr.vmem [resolvable:$true] %s65
      %68 = dma.hbm_to_vmem [thread:$0]  %s64, 64, %s66, [#allocation11]
    $region21: #{cnn_model_forward.1} parent=1 // pred_fallthru
      _
    // Predicated region
    $region22: #{cnn_model_forward.1} parent=1 // pred_check
      _
    $region23: #{cnn_model_forward.1} parent=1 // pred_check_branch
      %70 = sbr.rel (0) target = $region25
    $region24: #{cnn_model_forward.1} parent=1 // pred_region
      _
    $region25: #{cnn_model_forward.1} parent=1 // pred_fallthru
      _
    // Predicated region
    $region26: #{cnn_model_forward.1} parent=1 // pred_check
      _
    $region27: #{cnn_model_forward.1} parent=1 // pred_check_branch
      %72 = sbr.rel (0) target = $region29
    $region28: #{cnn_model_forward.1} parent=1 // pred_region
      %74 = vsyncadd [#allocation11], 0
      %s76 = sshll.u32 %s6, 4
      %s77 = int_to_ptr.hbm [resolvable:$true] %s76
      %s78 = sshll.u32 [#allocation12], 4
      %s79 = int_to_ptr.vmem [resolvable:$true] %s78
      %81 = dma.hbm_to_vmem [thread:$0]  %s77, 16, %s79, [#allocation11]
    $region29: #{cnn_model_forward.1} parent=1 // pred_fallthru
      _
    // Predicated region
    $region30: #{cnn_model_forward.1} parent=1 // pred_check
      _
    $region31: #{cnn_model_forward.1} parent=1 // pred_check_branch
      %83 = sbr.rel (0) target = $region33
    $region32: #{cnn_model_forward.1} parent=1 // pred_region
      _
    $region33: #{cnn_model_forward.1} parent=1 // pred_fallthru
      _
    // Predicated region
    $region34: #{cnn_model_forward.1} parent=1 // pred_check
      _
    $region35: #{cnn_model_forward.1} parent=1 // pred_check_branch
      %85 = sbr.rel (0) target = $region37
    $region36: #{cnn_model_forward.1} parent=1 // pred_region
      _
    $region37: #{cnn_model_forward.1} parent=1 // pred_fallthru
      _
    // Predicated region
    $region38: #{cnn_model_forward.1} parent=1 // pred_check
      _
    $region39: #{cnn_model_forward.1} parent=1 // pred_check_branch
      %87 = sbr.rel (0) target = $region41
    $region40: #{cnn_model_forward.1} parent=1 // pred_region
      %89 = dma.done [#allocation6], 18432
    $region41: #{cnn_model_forward.1} parent=1 // pred_fallthru
      _
    // Predicated region
    $region42: #{cnn_model_forward.1} parent=1 // pred_check
      _
    $region43: #{cnn_model_forward.1} parent=1 // pred_check_branch
      %91 = sbr.rel (0) target = $region45
    $region44: #{cnn_model_forward.1} parent=1 // pred_region
      %93 = dma.done [#allocation8], 32
    $region45: #{cnn_model_forward.1} parent=1 // pred_fallthru
      _
    // Predicated region
    $region46: #{cnn_model_forward.1} parent=1 // pred_check
      _
    $region47: #{cnn_model_forward.1} parent=1 // pred_check_branch
      %95 = sbr.rel (0) target = $region49
    $region48: #{cnn_model_forward.1} parent=1 // pred_region
      %97 = dma.done [#allocation8], 49152
    $region49: #{cnn_model_forward.1} parent=1 // pred_fallthru
      _
    // Predicated region
    $region50: #{cnn_model_forward.1} parent=1 // pred_check
      _
    $region51: #{cnn_model_forward.1} parent=1 // pred_check_branch
      %99 = sbr.rel (0) target = $region53
    $region52: #{cnn_model_forward.1} parent=1 // pred_region
      %101 = dma.done [#allocation11], 64
    $region53: #{cnn_model_forward.1} parent=1 // pred_fallthru
      _
    // Predicated region
    $region54: #{cnn_model_forward.1} parent=1 // pred_check
      _
    $region55: #{cnn_model_forward.1} parent=1 // pred_check_branch
      %103 = sbr.rel (0) target = $region57
    $region56: #{cnn_model_forward.1} parent=1 // pred_region
      %105 = dma.done [#allocation11], 16
    $region57: #{cnn_model_forward.1} parent=1 // pred_fallthru
      _
    %v106 = vlaneseq
    %vm107 = vcmp.ge.s32.totalorder %v106, 0
    %vm108 = vcmp.lt.s32.totalorder %v106, 192
    %vm109 = vmand %vm107, %vm108
    %110 = vst.msk [vmem:[#allocation2] ss:$8 sm:$0x3] %vm109, 0.0
    %111 = vst.msk [vmem:[#allocation2] ss:$8 sm:$0x0] %vm109, 0.0
    %s112 = scalar_lea.vmem [#allocation2], 48
    %113 = vst.msk [vmem:[%s112] ss:$8 sm:$0x3] %vm109, 0.0
    %114 = vst.msk [vmem:[%s112] ss:$8 sm:$0x0] %vm109, 0.0
    %s115 = scalar_lea.vmem [#allocation2], 33
    %116 = vst.msk [vmem:[%s115] ss:$8 sm:$0x3] %vm109, 0.0
    %117 = vst.msk [vmem:[%s115] ss:$8 sm:$0x0] %vm109, 0.0
    %s118 = scalar_lea.vmem [#allocation2], 81
    %119 = vst.msk [vmem:[%s118] ss:$8 sm:$0x3] %vm109, 0.0
    %120 = vst.msk [vmem:[%s118] ss:$8 sm:$0x0] %vm109, 0.0
    %v121 = vld [vmem:[%s0] sm:$0xff]
    %v122 = vld [vmem:[%s0 + $0x8] sm:$0xff]
    %v123 = vld [vmem:[%s0 + $0x10] sm:$0xff]
    %v124 = vld [vmem:[%s0 + $0x18] sm:$0xff]
    %v125 = vld [vmem:[%s0 + $0x20] sm:$0xff]
    %v126 = vld [vmem:[%s0 + $0x28] sm:$0xff]
    %v127 = vld [vmem:[%s0 + $0x30] sm:$0xff]
    %v128 = vld [vmem:[%s0 + $0x38] sm:$0xff]
    %vm137 = vcmask 1040384
    %v138 = vrot.slane %v121, 7
    %v139 = vrot.slane %v122, 7
    %v140 = vrot.slane %v123, 7
    %v141 = vsel %vm137, %v138, %v140
    %v142 = vrot.slane %v124, 7
    %v143 = vsel %vm137, %v139, %v142
    %v144 = vrot.slane %v125, 7
    %v145 = vrot.slane %v126, 7
    %v146 = vrot.slane %v127, 7
    %v147 = vsel %vm137, %v144, %v146
    %v148 = vrot.slane %v128, 7
    %v149 = vsel %vm137, %v145, %v148
    %162 = vst [vmem:[#allocation2] sm:$0xfe] %v138
    %vm163 = vcmask 523265
    %164 = vst.msk [vmem:[#allocation2 + $0x8] sm:$0xfe] %vm163, %v139
    %165 = vst [vmem:[#allocation2 + $0x10] sm:$0xff] %v141
    %vm166 = vcmask 523264
    %167 = vst.msk [vmem:[#allocation2 + $0x18] sm:$0xff] %vm166, %v143
    %168 = vst [vmem:[#allocation2 + $0x20] sm:$0x1] %v140
    %vm169 = vcmask 516096
    %170 = vst.msk [vmem:[#allocation2 + $0x28] sm:$0x1] %vm169, %v142
    %171 = vst [vmem:[#allocation2 + $0x30] sm:$0xfe] %v144
    %172 = vst.msk [vmem:[#allocation2 + $0x38] sm:$0xfe] %vm163, %v145
    %173 = vst [vmem:[#allocation2 + $0x40] sm:$0xff] %v147
    %174 = vst.msk [vmem:[#allocation2 + $0x48] sm:$0xff] %vm166, %v149
    %175 = vst [vmem:[#allocation2 + $0x50] sm:$0x1] %v146
    %176 = vst.msk [vmem:[#allocation2 + $0x58] sm:$0x1] %vm169, %v148
    %v177 = vld [vmem:[#allocation2] sm:$0xff]
    %v178 = vld [vmem:[#allocation2 + $0x8] sm:$0xff]
    %v179 = vld [vmem:[#allocation2 + $0x10] sm:$0xff]
    %v180 = vld [vmem:[#allocation2 + $0x18] sm:$0xff]
    %v181 = vld [vmem:[#allocation2 + $0x30] sm:$0xff]
    %v182 = vld [vmem:[#allocation2 + $0x38] sm:$0xff]
    %v183 = vld [vmem:[#allocation2 + $0x40] sm:$0xff]
    %v184 = vld [vmem:[#allocation2 + $0x48] sm:$0xff]
    %v185 = vld [vmem:[#allocation5] sm:$0xff]
    %v186 = vld [vmem:[#allocation5 + $0x8] sm:$0xff]
    %v187 = vld [vmem:[#allocation5 + $0x10] sm:$0xff]
    %v188 = vld [vmem:[#allocation5 + $0x18] sm:$0xff]
    %v189 = vld [vmem:[#allocation5 + $0x20] sm:$0xff]
    %v190 = vld [vmem:[#allocation5 + $0x28] sm:$0xff]
    %v191 = vld [vmem:[#allocation5 + $0x30] sm:$0xff]
    %v192 = vld [vmem:[#allocation5 + $0x38] sm:$0xff]
    %v193 = vld [vmem:[#allocation5 + $0x40] sm:$0xff]
    %v194 = vld [vmem:[#allocation5 + $0x48] sm:$0xff]
    %v195 = vld [vmem:[#allocation5 + $0x50] sm:$0xff]
    %v196 = vld [vmem:[#allocation5 + $0x58] sm:$0xff]
    %v197 = vld [vmem:[#allocation5 + $0x60] sm:$0xff]
    %v198 = vld [vmem:[#allocation5 + $0x68] sm:$0xff]
    %v199 = vld [vmem:[#allocation5 + $0x70] sm:$0xff]
    %v200 = vld [vmem:[#allocation5 + $0x78] sm:$0xff]
    %v201 = vld [vmem:[#allocation5 + $0x80] sm:$0xff]
    %v202 = vld [vmem:[#allocation5 + $0x88] sm:$0xff]
    %v203 = vld [vmem:[#allocation5 + $0x90] sm:$0xff]
    %v204 = vld [vmem:[#allocation5 + $0x98] sm:$0xff]
    %v205 = vld [vmem:[#allocation5 + $0xa0] sm:$0xff]
    %v206 = vld [vmem:[#allocation5 + $0xa8] sm:$0xff]
    %v207 = vld [vmem:[#allocation5 + $0xb0] sm:$0xff]
    %v208 = vld [vmem:[#allocation5 + $0xb8] sm:$0xff]
    %v209 = vld [vmem:[#allocation5 + $0xc0] sm:$0xff]
    %v210 = vld [vmem:[#allocation5 + $0xc8] sm:$0xff]
    %v211 = vld [vmem:[#allocation5 + $0xd0] sm:$0xff]
    %v212 = vld [vmem:[#allocation5 + $0xd8] sm:$0xff]
    %v213 = vld [vmem:[#allocation5 + $0xe0] sm:$0xff]
    %v214 = vld [vmem:[#allocation5 + $0xe8] sm:$0xff]
    %v215 = vld [vmem:[#allocation5 + $0xf0] sm:$0xff]
    %v216 = vld [vmem:[#allocation5 + $0xf8] sm:$0xff]
    %v217 = vld [vmem:[#allocation5 + $0x100] sm:$0xff]
    %v218 = vld [vmem:[#allocation5 + $0x108] sm:$0xff]
    %v219 = vld [vmem:[#allocation5 + $0x110] sm:$0xff]
    %v220 = vld [vmem:[#allocation5 + $0x118] sm:$0xff]
    %v221 = vld [vmem:[#allocation5 + $0x120] sm:$0xff]
    %v222 = vld [vmem:[#allocation5 + $0x128] sm:$0xff]
    %v223 = vld [vmem:[#allocation5 + $0x130] sm:$0xff]
    %v224 = vld [vmem:[#allocation5 + $0x138] sm:$0xff]
    %v225 = vld [vmem:[#allocation5 + $0x140] sm:$0xff]
    %v226 = vld [vmem:[#allocation5 + $0x148] sm:$0xff]
    %v227 = vld [vmem:[#allocation5 + $0x150] sm:$0xff]
    %v228 = vld [vmem:[#allocation5 + $0x158] sm:$0xff]
    %v229 = vld [vmem:[#allocation5 + $0x160] sm:$0xff]
    %v230 = vld [vmem:[#allocation5 + $0x168] sm:$0xff]
    %v231 = vld [vmem:[#allocation5 + $0x170] sm:$0xff]
    %v232 = vld [vmem:[#allocation5 + $0x178] sm:$0xff]
    %v233 = vld [vmem:[#allocation2] sm:$0xfe]
    %v234 = vld [vmem:[#allocation2 + $0x8] sm:$0xfe]
    %v235 = vld [vmem:[#allocation2 + $0x20] sm:$0x1]
    %v236 = vld [vmem:[#allocation2 + $0x28] sm:$0x1]
    %v237 = vld [vmem:[#allocation2 + $0x30] sm:$0xfe]
    %v238 = vld [vmem:[#allocation2 + $0x38] sm:$0xfe]
    %v239 = vld [vmem:[#allocation2 + $0x50] sm:$0x1]
    %v240 = vld [vmem:[#allocation2 + $0x58] sm:$0x1]
    %vm253 = vcmask 1046528
    %v254 = vrot.slane %v233, 1
    %v255 = vrot.slane %v179, 1
    %v256 = vsel %vm253, %v254, %v255
    %v257 = vrot.slane %v234, 1
    %v258 = vrot.slane %v180, 1
    %v259 = vsel %vm253, %v257, %v258
    %v260 = vrot.slane %v235, 1
    %v261 = vsel %vm253, %v255, %v260
    %v262 = vrot.slane %v236, 1
    %v263 = vsel %vm253, %v258, %v262
    %v264 = vrot.slane %v237, 1
    %v265 = vrot.slane %v183, 1
    %v266 = vsel %vm253, %v264, %v265
    %v267 = vrot.slane %v238, 1
    %v268 = vrot.slane %v184, 1
    %v269 = vsel %vm253, %v267, %v268
    %v270 = vrot.slane %v239, 1
    %v271 = vsel %vm253, %v265, %v270
    %v272 = vrot.slane %v240, 1
    %v273 = vsel %vm253, %v268, %v272
    %s278 = scalar_lea.vmem [#allocation5], 384
    %v279 = vld [vmem:[%s278] sm:$0xff]
    %v280 = vld [vmem:[%s278 + $0x8] sm:$0xff]
    %v281 = vld [vmem:[%s278 + $0x10] sm:$0xff]
    %v282 = vld [vmem:[%s278 + $0x18] sm:$0xff]
    %v283 = vld [vmem:[%s278 + $0x20] sm:$0xff]
    %v284 = vld [vmem:[%s278 + $0x28] sm:$0xff]
    %v285 = vld [vmem:[%s278 + $0x30] sm:$0xff]
    %v286 = vld [vmem:[%s278 + $0x38] sm:$0xff]
    %v287 = vld [vmem:[%s278 + $0x40] sm:$0xff]
    %v288 = vld [vmem:[%s278 + $0x48] sm:$0xff]
    %v289 = vld [vmem:[%s278 + $0x50] sm:$0xff]
    %v290 = vld [vmem:[%s278 + $0x58] sm:$0xff]
    %v291 = vld [vmem:[%s278 + $0x60] sm:$0xff]
    %v292 = vld [vmem:[%s278 + $0x68] sm:$0xff]
    %v293 = vld [vmem:[%s278 + $0x70] sm:$0xff]
    %v294 = vld [vmem:[%s278 + $0x78] sm:$0xff]
    %v295 = vld [vmem:[%s278 + $0x80] sm:$0xff]
    %v296 = vld [vmem:[%s278 + $0x88] sm:$0xff]
    %v297 = vld [vmem:[%s278 + $0x90] sm:$0xff]
    %v298 = vld [vmem:[%s278 + $0x98] sm:$0xff]
    %v299 = vld [vmem:[%s278 + $0xa0] sm:$0xff]
    %v300 = vld [vmem:[%s278 + $0xa8] sm:$0xff]
    %v301 = vld [vmem:[%s278 + $0xb0] sm:$0xff]
    %v302 = vld [vmem:[%s278 + $0xb8] sm:$0xff]
    %v303 = vld [vmem:[%s278 + $0xc0] sm:$0xff]
    %v304 = vld [vmem:[%s278 + $0xc8] sm:$0xff]
    %v305 = vld [vmem:[%s278 + $0xd0] sm:$0xff]
    %v306 = vld [vmem:[%s278 + $0xd8] sm:$0xff]
    %v307 = vld [vmem:[%s278 + $0xe0] sm:$0xff]
    %v308 = vld [vmem:[%s278 + $0xe8] sm:$0xff]
    %v309 = vld [vmem:[%s278 + $0xf0] sm:$0xff]
    %v310 = vld [vmem:[%s278 + $0xf8] sm:$0xff]
    %v311 = vld [vmem:[%s278 + $0x100] sm:$0xff]
    %v312 = vld [vmem:[%s278 + $0x108] sm:$0xff]
    %v313 = vld [vmem:[%s278 + $0x110] sm:$0xff]
    %v314 = vld [vmem:[%s278 + $0x118] sm:$0xff]
    %v315 = vld [vmem:[%s278 + $0x120] sm:$0xff]
    %v316 = vld [vmem:[%s278 + $0x128] sm:$0xff]
    %v317 = vld [vmem:[%s278 + $0x130] sm:$0xff]
    %v318 = vld [vmem:[%s278 + $0x138] sm:$0xff]
    %v319 = vld [vmem:[%s278 + $0x140] sm:$0xff]
    %v320 = vld [vmem:[%s278 + $0x148] sm:$0xff]
    %v321 = vld [vmem:[%s278 + $0x150] sm:$0xff]
    %v322 = vld [vmem:[%s278 + $0x158] sm:$0xff]
    %v323 = vld [vmem:[%s278 + $0x160] sm:$0xff]
    %v324 = vld [vmem:[%s278 + $0x168] sm:$0xff]
    %v325 = vld [vmem:[%s278 + $0x170] sm:$0xff]
    %v326 = vld [vmem:[%s278 + $0x178] sm:$0xff]
    %v327 = vsel %vm166, %v259, 0
    %v329 = vsel %vm166, %v263, 0
    %v331 = vsel %vm166, %v269, 0
    %v333 = vsel %vm166, %v273, 0
    %335 = vmatpush.msra.mxu0 %v309
    %336 = vmatpush.msra.mxu0 %v307
    %337 = vmatpush.msra.mxu0 %v305
    %338 = vmatpush.msra.mxu0 %v303
    %339 = vmatpush.msra.mxu0 %v301
    %340 = vmatpush.msra.mxu0 %v299
    %341 = vmatpush.msra.mxu0 %v297
    %342 = vmatpush.msra.mxu0 %v295
    %343 = vmatpush.msra.mxu0 %v293
    %344 = vmatpush.msra.mxu0 %v291
    %345 = vmatpush.msra.mxu0 %v289
    %346 = vmatpush.msra.mxu0 %v287
    %347 = vmatpush.msra.mxu0 %v285
    %348 = vmatpush.msra.mxu0 %v283
    %349 = vmatpush.msra.mxu0 %v281
    %350 = vmatpush.msra.mxu0 %v279
    %351 = vmatmul.f32.gmra.mxu0 %v256
    %v352 = vpop.f32.mrf.mxu0
    %v353 = vadd.f32 0.0, %v352
    %354 = vmatmul.f32.gmra.mxu0 %v261
    %v355 = vpop.f32.mrf.mxu0
    %v356 = vadd.f32 0.0, %v355
    %357 = vmatmul.f32.gmra.mxu0 %v266
    %v358 = vpop.f32.mrf.mxu0
    %v359 = vadd.f32 0.0, %v358
    %360 = vmatmul.f32.gmra.mxu0 %v271
    %v361 = vpop.f32.mrf.mxu0
    %v362 = vadd.f32 0.0, %v361
    %363 = vdwg.mxu0
    %364 = vmatpush.msra.mxu0 0.0
    %365 = vmatpush.msra.mxu0 0.0
    %366 = vmatpush.msra.mxu0 0.0
    %367 = vmatpush.msra.mxu0 0.0
    %368 = vmatpush.msra.mxu0 0.0
    %369 = vmatpush.msra.mxu0 0.0
    %370 = vmatpush.msra.mxu0 0.0
    %371 = vmatpush.msra.mxu0 0.0
    %372 = vmatpush.msra.mxu0 %v325
    %373 = vmatpush.msra.mxu0 %v323
    %374 = vmatpush.msra.mxu0 %v321
    %375 = vmatpush.msra.mxu0 %v319
    %376 = vmatpush.msra.mxu0 %v317
    %377 = vmatpush.msra.mxu0 %v315
    %378 = vmatpush.msra.mxu0 %v313
    %379 = vmatpush.msra.mxu0 %v311
    %380 = vmatmul.f32.gmra.mxu0 %v327
    %v381 = vpop.f32.mrf.mxu0
    %v382 = vadd.f32 %v353, %v381
    %383 = vmatmul.f32.gmra.mxu0 %v329
    %v384 = vpop.f32.mrf.mxu0
    %v385 = vadd.f32 %v356, %v384
    %386 = vmatmul.f32.gmra.mxu0 %v331
    %v387 = vpop.f32.mrf.mxu0
    %v388 = vadd.f32 %v359, %v387
    %389 = vmatmul.f32.gmra.mxu0 %v333
    %v390 = vpop.f32.mrf.mxu0
    %v391 = vadd.f32 %v362, %v390
    %392 = vdwg.mxu0
    %393 = vmatpush.msra.mxu0 %v310
    %394 = vmatpush.msra.mxu0 %v308
    %395 = vmatpush.msra.mxu0 %v306
    %396 = vmatpush.msra.mxu0 %v304
    %397 = vmatpush.msra.mxu0 %v302
    %398 = vmatpush.msra.mxu0 %v300
    %399 = vmatpush.msra.mxu0 %v298
    %400 = vmatpush.msra.mxu0 %v296
    %401 = vmatpush.msra.mxu0 %v294
    %402 = vmatpush.msra.mxu0 %v292
    %403 = vmatpush.msra.mxu0 %v290
    %404 = vmatpush.msra.mxu0 %v288
    %405 = vmatpush.msra.mxu0 %v286
    %406 = vmatpush.msra.mxu0 %v284
    %407 = vmatpush.msra.mxu0 %v282
    %408 = vmatpush.msra.mxu0 %v280
    %409 = vmatmul.f32.gmra.mxu0 %v256
    %v410 = vpop.f32.mrf.mxu0
    %v411 = vadd.f32 0.0, %v410
    %412 = vmatmul.f32.gmra.mxu0 %v261
    %v413 = vpop.f32.mrf.mxu0
    %v414 = vadd.f32 0.0, %v413
    %415 = vmatmul.f32.gmra.mxu0 %v266
    %v416 = vpop.f32.mrf.mxu0
    %v417 = vadd.f32 0.0, %v416
    %418 = vmatmul.f32.gmra.mxu0 %v271
    %v419 = vpop.f32.mrf.mxu0
    %v420 = vadd.f32 0.0, %v419
    %421 = vdwg.mxu0
    %422 = vmatpush.msra.mxu0 0.0
    %423 = vmatpush.msra.mxu0 0.0
    %424 = vmatpush.msra.mxu0 0.0
    %425 = vmatpush.msra.mxu0 0.0
    %426 = vmatpush.msra.mxu0 0.0
    %427 = vmatpush.msra.mxu0 0.0
    %428 = vmatpush.msra.mxu0 0.0
    %429 = vmatpush.msra.mxu0 0.0
    %430 = vmatpush.msra.mxu0 %v326
    %431 = vmatpush.msra.mxu0 %v324
    %432 = vmatpush.msra.mxu0 %v322
    %433 = vmatpush.msra.mxu0 %v320
    %434 = vmatpush.msra.mxu0 %v318
    %435 = vmatpush.msra.mxu0 %v316
    %436 = vmatpush.msra.mxu0 %v314
    %437 = vmatpush.msra.mxu0 %v312
    %438 = vmatmul.f32.gmra.mxu0 %v327
    %v439 = vpop.f32.mrf.mxu0
    %v440 = vadd.f32 %v411, %v439
    %441 = vmatmul.f32.gmra.mxu0 %v329
    %v442 = vpop.f32.mrf.mxu0
    %v443 = vadd.f32 %v414, %v442
    %444 = vmatmul.f32.gmra.mxu0 %v331
    %v445 = vpop.f32.mrf.mxu0
    %v446 = vadd.f32 %v417, %v445
    %447 = vmatmul.f32.gmra.mxu0 %v333
    %v448 = vpop.f32.mrf.mxu0
    %v449 = vadd.f32 %v420, %v448
    %450 = vdwg.mxu0
    %v452 = vsel %vm166, %v178, 0
    %v454 = vsel %vm166, %v180, 0
    %v457 = vsel %vm166, %v182, 0
    %v459 = vsel %vm166, %v184, 0
    %461 = vmatpush.msra.mxu0 %v215
    %462 = vmatpush.msra.mxu0 %v213
    %463 = vmatpush.msra.mxu0 %v211
    %464 = vmatpush.msra.mxu0 %v209
    %465 = vmatpush.msra.mxu0 %v207
    %466 = vmatpush.msra.mxu0 %v205
    %467 = vmatpush.msra.mxu0 %v203
    %468 = vmatpush.msra.mxu0 %v201
    %469 = vmatpush.msra.mxu0 %v199
    %470 = vmatpush.msra.mxu0 %v197
    %471 = vmatpush.msra.mxu0 %v195
    %472 = vmatpush.msra.mxu0 %v193
    %473 = vmatpush.msra.mxu0 %v191
    %474 = vmatpush.msra.mxu0 %v189
    %475 = vmatpush.msra.mxu0 %v187
    %476 = vmatpush.msra.mxu0 %v185
    %477 = vmatmul.f32.gmra.mxu0 %v177
    %v478 = vpop.f32.mrf.mxu0
    %v479 = vadd.f32 %v382, %v478
    %480 = vmatmul.f32.gmra.mxu0 %v179
    %v481 = vpop.f32.mrf.mxu0
    %v482 = vadd.f32 %v385, %v481
    %483 = vmatmul.f32.gmra.mxu0 %v181
    %v484 = vpop.f32.mrf.mxu0
    %v485 = vadd.f32 %v388, %v484
    %486 = vmatmul.f32.gmra.mxu0 %v183
    %v487 = vpop.f32.mrf.mxu0
    %v488 = vadd.f32 %v391, %v487
    %489 = vdwg.mxu0
    %490 = vmatpush.msra.mxu0 0.0
    %491 = vmatpush.msra.mxu0 0.0
    %492 = vmatpush.msra.mxu0 0.0
    %493 = vmatpush.msra.mxu0 0.0
    %494 = vmatpush.msra.mxu0 0.0
    %495 = vmatpush.msra.mxu0 0.0
    %496 = vmatpush.msra.mxu0 0.0
    %497 = vmatpush.msra.mxu0 0.0
    %498 = vmatpush.msra.mxu0 %v231
    %499 = vmatpush.msra.mxu0 %v229
    %500 = vmatpush.msra.mxu0 %v227
    %501 = vmatpush.msra.mxu0 %v225
    %502 = vmatpush.msra.mxu0 %v223
    %503 = vmatpush.msra.mxu0 %v221
    %504 = vmatpush.msra.mxu0 %v219
    %505 = vmatpush.msra.mxu0 %v217
    %506 = vmatmul.f32.gmra.mxu0 %v452
    %v507 = vpop.f32.mrf.mxu0
    %v508 = vadd.f32 %v479, %v507
    %509 = vmatmul.f32.gmra.mxu0 %v454
    %v510 = vpop.f32.mrf.mxu0
    %v511 = vadd.f32 %v482, %v510
    %512 = vmatmul.f32.gmra.mxu0 %v457
    %v513 = vpop.f32.mrf.mxu0
    %v514 = vadd.f32 %v485, %v513
    %515 = vmatmul.f32.gmra.mxu0 %v459
    %v516 = vpop.f32.mrf.mxu0
    %v517 = vadd.f32 %v488, %v516
    %518 = vdwg.mxu0
    %519 = vmatpush.msra.mxu0 %v216
    %520 = vmatpush.msra.mxu0 %v214
    %521 = vmatpush.msra.mxu0 %v212
    %522 = vmatpush.msra.mxu0 %v210
    %523 = vmatpush.msra.mxu0 %v208
    %524 = vmatpush.msra.mxu0 %v206
    %525 = vmatpush.msra.mxu0 %v204
    %526 = vmatpush.msra.mxu0 %v202
    %527 = vmatpush.msra.mxu0 %v200
    %528 = vmatpush.msra.mxu0 %v198
    %529 = vmatpush.msra.mxu0 %v196
    %530 = vmatpush.msra.mxu0 %v194
    %531 = vmatpush.msra.mxu0 %v192
    %532 = vmatpush.msra.mxu0 %v190
    %533 = vmatpush.msra.mxu0 %v188
    %534 = vmatpush.msra.mxu0 %v186
    %535 = vmatmul.f32.gmra.mxu0 %v177
    %v536 = vpop.f32.mrf.mxu0
    %v537 = vadd.f32 %v440, %v536
    %538 = vmatmul.f32.gmra.mxu0 %v179
    %v539 = vpop.f32.mrf.mxu0
    %v540 = vadd.f32 %v443, %v539
    %541 = vmatmul.f32.gmra.mxu0 %v181
    %v542 = vpop.f32.mrf.mxu0
    %v543 = vadd.f32 %v446, %v542
    %544 = vmatmul.f32.gmra.mxu0 %v183
    %v545 = vpop.f32.mrf.mxu0
    %v546 = vadd.f32 %v449, %v545
    %547 = vdwg.mxu0
    %548 = vmatpush.msra.mxu0 0.0
    %549 = vmatpush.msra.mxu0 0.0
    %550 = vmatpush.msra.mxu0 0.0
    %551 = vmatpush.msra.mxu0 0.0
    %552 = vmatpush.msra.mxu0 0.0
    %553 = vmatpush.msra.mxu0 0.0
    %554 = vmatpush.msra.mxu0 0.0
    %555 = vmatpush.msra.mxu0 0.0
    %556 = vmatpush.msra.mxu0 %v232
    %557 = vmatpush.msra.mxu0 %v230
    %558 = vmatpush.msra.mxu0 %v228
    %559 = vmatpush.msra.mxu0 %v226
    %560 = vmatpush.msra.mxu0 %v224
    %561 = vmatpush.msra.mxu0 %v222
    %562 = vmatpush.msra.mxu0 %v220
    %563 = vmatpush.msra.mxu0 %v218
    %564 = vmatmul.f32.gmra.mxu0 %v452
    %v565 = vpop.f32.mrf.mxu0
    %v566 = vadd.f32 %v537, %v565
    %567 = vmatmul.f32.gmra.mxu0 %v454
    %v568 = vpop.f32.mrf.mxu0
    %v569 = vadd.f32 %v540, %v568
    %570 = vmatmul.f32.gmra.mxu0 %v457
    %v571 = vpop.f32.mrf.mxu0
    %v572 = vadd.f32 %v543, %v571
    %573 = vmatmul.f32.gmra.mxu0 %v459
    %v574 = vpop.f32.mrf.mxu0
    %v575 = vadd.f32 %v546, %v574
    %576 = vdwg.mxu0
    %v577 = vld [vmem:[#allocation2] sm:$0xfc]
    %v578 = vld [vmem:[#allocation2 + $0x8] sm:$0xfc]
    %v579 = vld [vmem:[#allocation2 + $0x20] sm:$0x3]
    %v580 = vld [vmem:[#allocation2 + $0x28] sm:$0x3]
    %v581 = vld [vmem:[#allocation2 + $0x30] sm:$0xfc]
    %v582 = vld [vmem:[#allocation2 + $0x38] sm:$0xfc]
    %v583 = vld [vmem:[#allocation2 + $0x50] sm:$0x3]
    %v584 = vld [vmem:[#allocation2 + $0x58] sm:$0x3]
    %vm593 = vcmask 1045504
    %v594 = vrot.slane %v577, 2
    %v595 = vrot.slane %v179, 2
    %v596 = vsel %vm593, %v594, %v595
    %v597 = vrot.slane %v578, 2
    %v598 = vrot.slane %v180, 2
    %v599 = vsel %vm593, %v597, %v598
    %v600 = vrot.slane %v579, 2
    %v601 = vsel %vm593, %v595, %v600
    %v602 = vrot.slane %v580, 2
    %v603 = vsel %vm593, %v598, %v602
    %v604 = vrot.slane %v581, 2
    %v605 = vrot.slane %v183, 2
    %v606 = vsel %vm593, %v604, %v605
    %v607 = vrot.slane %v582, 2
    %v608 = vrot.slane %v184, 2
    %v609 = vsel %vm593, %v607, %v608
    %v610 = vrot.slane %v583, 2
    %v611 = vsel %vm593, %v605, %v610
    %v612 = vrot.slane %v584, 2
    %v613 = vsel %vm593, %v608, %v612
    %s618 = scalar_lea.vmem [#allocation5], 768
    %v619 = vld [vmem:[%s618] sm:$0xff]
    %v620 = vld [vmem:[%s618 + $0x8] sm:$0xff]
    %v621 = vld [vmem:[%s618 + $0x10] sm:$0xff]
    %v622 = vld [vmem:[%s618 + $0x18] sm:$0xff]
    %v623 = vld [vmem:[%s618 + $0x20] sm:$0xff]
    %v624 = vld [vmem:[%s618 + $0x28] sm:$0xff]
    %v625 = vld [vmem:[%s618 + $0x30] sm:$0xff]
    %v626 = vld [vmem:[%s618 + $0x38] sm:$0xff]
    %v627 = vld [vmem:[%s618 + $0x40] sm:$0xff]
    %v628 = vld [vmem:[%s618 + $0x48] sm:$0xff]
    %v629 = vld [vmem:[%s618 + $0x50] sm:$0xff]
    %v630 = vld [vmem:[%s618 + $0x58] sm:$0xff]
    %v631 = vld [vmem:[%s618 + $0x60] sm:$0xff]
    %v632 = vld [vmem:[%s618 + $0x68] sm:$0xff]
    %v633 = vld [vmem:[%s618 + $0x70] sm:$0xff]
    %v634 = vld [vmem:[%s618 + $0x78] sm:$0xff]
    %v635 = vld [vmem:[%s618 + $0x80] sm:$0xff]
    %v636 = vld [vmem:[%s618 + $0x88] sm:$0xff]
    %v637 = vld [vmem:[%s618 + $0x90] sm:$0xff]
    %v638 = vld [vmem:[%s618 + $0x98] sm:$0xff]
    %v639 = vld [vmem:[%s618 + $0xa0] sm:$0xff]
    %v640 = vld [vmem:[%s618 + $0xa8] sm:$0xff]
    %v641 = vld [vmem:[%s618 + $0xb0] sm:$0xff]
    %v642 = vld [vmem:[%s618 + $0xb8] sm:$0xff]
    %v643 = vld [vmem:[%s618 + $0xc0] sm:$0xff]
    %v644 = vld [vmem:[%s618 + $0xc8] sm:$0xff]
    %v645 = vld [vmem:[%s618 + $0xd0] sm:$0xff]
    %v646 = vld [vmem:[%s618 + $0xd8] sm:$0xff]
    %v647 = vld [vmem:[%s618 + $0xe0] sm:$0xff]
    %v648 = vld [vmem:[%s618 + $0xe8] sm:$0xff]
    %v649 = vld [vmem:[%s618 + $0xf0] sm:$0xff]
    %v650 = vld [vmem:[%s618 + $0xf8] sm:$0xff]
    %v651 = vld [vmem:[%s618 + $0x100] sm:$0xff]
    %v652 = vld [vmem:[%s618 + $0x108] sm:$0xff]
    %v653 = vld [vmem:[%s618 + $0x110] sm:$0xff]
    %v654 = vld [vmem:[%s618 + $0x118] sm:$0xff]
    %v655 = vld [vmem:[%s618 + $0x120] sm:$0xff]
    %v656 = vld [vmem:[%s618 + $0x128] sm:$0xff]
    %v657 = vld [vmem:[%s618 + $0x130] sm:$0xff]
    %v658 = vld [vmem:[%s618 + $0x138] sm:$0xff]
    %v659 = vld [vmem:[%s618 + $0x140] sm:$0xff]
    %v660 = vld [vmem:[%s618 + $0x148] sm:$0xff]
    %v661 = vld [vmem:[%s618 + $0x150] sm:$0xff]
    %v662 = vld [vmem:[%s618 + $0x158] sm:$0xff]
    %v663 = vld [vmem:[%s618 + $0x160] sm:$0xff]
    %v664 = vld [vmem:[%s618 + $0x168] sm:$0xff]
    %v665 = vld [vmem:[%s618 + $0x170] sm:$0xff]
    %v666 = vld [vmem:[%s618 + $0x178] sm:$0xff]
    %v667 = vsel %vm166, %v599, 0
    %v669 = vsel %vm166, %v603, 0
    %v671 = vsel %vm166, %v609, 0
    %v673 = vsel %vm166, %v613, 0
    %675 = vmatpush.msra.mxu0 %v649
    %676 = vmatpush.msra.mxu0 %v647
    %677 = vmatpush.msra.mxu0 %v645
    %678 = vmatpush.msra.mxu0 %v643
    %679 = vmatpush.msra.mxu0 %v641
    %680 = vmatpush.msra.mxu0 %v639
    %681 = vmatpush.msra.mxu0 %v637
    %682 = vmatpush.msra.mxu0 %v635
    %683 = vmatpush.msra.mxu0 %v633
    %684 = vmatpush.msra.mxu0 %v631
    %685 = vmatpush.msra.mxu0 %v629
    %686 = vmatpush.msra.mxu0 %v627
    %687 = vmatpush.msra.mxu0 %v625
    %688 = vmatpush.msra.mxu0 %v623
    %689 = vmatpush.msra.mxu0 %v621
    %690 = vmatpush.msra.mxu0 %v619
    %691 = vmatmul.f32.gmra.mxu0 %v596
    %v692 = vpop.f32.mrf.mxu0
    %v693 = vadd.f32 0.0, %v692
    %694 = vmatmul.f32.gmra.mxu0 %v601
    %v695 = vpop.f32.mrf.mxu0
    %v696 = vadd.f32 0.0, %v695
    %697 = vmatmul.f32.gmra.mxu0 %v606
    %v698 = vpop.f32.mrf.mxu0
    %v699 = vadd.f32 0.0, %v698
    %700 = vmatmul.f32.gmra.mxu0 %v611
    %v701 = vpop.f32.mrf.mxu0
    %v702 = vadd.f32 0.0, %v701
    %703 = vdwg.mxu0
    %704 = vmatpush.msra.mxu0 0.0
    %705 = vmatpush.msra.mxu0 0.0
    %706 = vmatpush.msra.mxu0 0.0
    %707 = vmatpush.msra.mxu0 0.0
    %708 = vmatpush.msra.mxu0 0.0
    %709 = vmatpush.msra.mxu0 0.0
    %710 = vmatpush.msra.mxu0 0.0
    %711 = vmatpush.msra.mxu0 0.0
    %712 = vmatpush.msra.mxu0 %v665
    %713 = vmatpush.msra.mxu0 %v663
    %714 = vmatpush.msra.mxu0 %v661
    %715 = vmatpush.msra.mxu0 %v659
    %716 = vmatpush.msra.mxu0 %v657
    %717 = vmatpush.msra.mxu0 %v655
    %718 = vmatpush.msra.mxu0 %v653
    %719 = vmatpush.msra.mxu0 %v651
    %720 = vmatmul.f32.gmra.mxu0 %v667
    %v721 = vpop.f32.mrf.mxu0
    %v722 = vadd.f32 %v693, %v721
    %723 = vmatmul.f32.gmra.mxu0 %v669
    %v724 = vpop.f32.mrf.mxu0
    %v725 = vadd.f32 %v696, %v724
    %726 = vmatmul.f32.gmra.mxu0 %v671
    %v727 = vpop.f32.mrf.mxu0
    %v728 = vadd.f32 %v699, %v727
    %729 = vmatmul.f32.gmra.mxu0 %v673
    %v730 = vpop.f32.mrf.mxu0
    %v731 = vadd.f32 %v702, %v730
    %732 = vdwg.mxu0
    %733 = vmatpush.msra.mxu0 %v650
    %734 = vmatpush.msra.mxu0 %v648
    %735 = vmatpush.msra.mxu0 %v646
    %736 = vmatpush.msra.mxu0 %v644
    %737 = vmatpush.msra.mxu0 %v642
    %738 = vmatpush.msra.mxu0 %v640
    %739 = vmatpush.msra.mxu0 %v638
    %740 = vmatpush.msra.mxu0 %v636
    %741 = vmatpush.msra.mxu0 %v634
    %742 = vmatpush.msra.mxu0 %v632
    %743 = vmatpush.msra.mxu0 %v630
    %744 = vmatpush.msra.mxu0 %v628
    %745 = vmatpush.msra.mxu0 %v626
    %746 = vmatpush.msra.mxu0 %v624
    %747 = vmatpush.msra.mxu0 %v622
    %748 = vmatpush.msra.mxu0 %v620
    %749 = vmatmul.f32.gmra.mxu0 %v596
    %v750 = vpop.f32.mrf.mxu0
    %v751 = vadd.f32 0.0, %v750
    %752 = vmatmul.f32.gmra.mxu0 %v601
    %v753 = vpop.f32.mrf.mxu0
    %v754 = vadd.f32 0.0, %v753
    %755 = vmatmul.f32.gmra.mxu0 %v606
    %v756 = vpop.f32.mrf.mxu0
    %v757 = vadd.f32 0.0, %v756
    %758 = vmatmul.f32.gmra.mxu0 %v611
    %v759 = vpop.f32.mrf.mxu0
    %v760 = vadd.f32 0.0, %v759
    %761 = vdwg.mxu0
    %762 = vmatpush.msra.mxu0 0.0
    %763 = vmatpush.msra.mxu0 0.0
    %764 = vmatpush.msra.mxu0 0.0
    %765 = vmatpush.msra.mxu0 0.0
    %766 = vmatpush.msra.mxu0 0.0
    %767 = vmatpush.msra.mxu0 0.0
    %768 = vmatpush.msra.mxu0 0.0
    %769 = vmatpush.msra.mxu0 0.0
    %770 = vmatpush.msra.mxu0 %v666
    %771 = vmatpush.msra.mxu0 %v664
    %772 = vmatpush.msra.mxu0 %v662
    %773 = vmatpush.msra.mxu0 %v660
    %774 = vmatpush.msra.mxu0 %v658
    %775 = vmatpush.msra.mxu0 %v656
    %776 = vmatpush.msra.mxu0 %v654
    %777 = vmatpush.msra.mxu0 %v652
    %778 = vmatmul.f32.gmra.mxu0 %v667
    %v779 = vpop.f32.mrf.mxu0
    %v780 = vadd.f32 %v751, %v779
    %781 = vmatmul.f32.gmra.mxu0 %v669
    %v782 = vpop.f32.mrf.mxu0
    %v783 = vadd.f32 %v754, %v782
    %784 = vmatmul.f32.gmra.mxu0 %v671
    %v785 = vpop.f32.mrf.mxu0
    %v786 = vadd.f32 %v757, %v785
    %787 = vmatmul.f32.gmra.mxu0 %v673
    %v788 = vpop.f32.mrf.mxu0
    %v789 = vadd.f32 %v760, %v788
    %790 = vdwg.mxu0
    %v791 = vadd.f32 %v508, %v722
    %v792 = vadd.f32 %v566, %v780
    %v793 = vadd.f32 %v511, %v725
    %v794 = vadd.f32 %v569, %v783
    %v795 = vadd.f32 %v514, %v728
    %v796 = vadd.f32 %v572, %v786
    %v797 = vadd.f32 %v517, %v731
    %v798 = vadd.f32 %v575, %v789
    %v799 = vld [vmem:[#allocation7] sm:$0x3]
    %v801 = vperm.slane %v799, 0
    %v802 = vperm.slane %v799, 1
    %v805 = vadd.f32 %v791, %v801
    %v806 = vadd.f32 %v792, %v802
    %v807 = vadd.f32 %v793, %v801
    %v808 = vadd.f32 %v794, %v802
    %v809 = vadd.f32 %v795, %v801
    %v810 = vadd.f32 %v796, %v802
    %v811 = vadd.f32 %v797, %v801
    %v812 = vadd.f32 %v798, %v802
    %v813 = vmax.f32 %v805, 0.0
    %v814 = vmax.f32 %v806, 0.0
    %v815 = vmax.f32 %v807, 0.0
    %v816 = vmax.f32 %v808, 0.0
    %v817 = vmax.f32 %v809, 0.0
    %v818 = vmax.f32 %v810, 0.0
    %v819 = vmax.f32 %v811, 0.0
    %v820 = vmax.f32 %v812, 0.0
    %vm821 = vcmp.lt.s32.totalorder %v106, 256
    %vm822 = vmand %vm107, %vm821
    %823 = vst.msk [vmem:[#allocation3] ss:$8 sm:$0x3] %vm822, 0.0
    %824 = vst.msk [vmem:[#allocation3] ss:$8 sm:$0x0] %vm822, 0.0
    %s825 = scalar_lea.vmem [#allocation3], 48
    %826 = vst.msk [vmem:[%s825] ss:$8 sm:$0x3] %vm822, 0.0
    %827 = vst.msk [vmem:[%s825] ss:$8 sm:$0x0] %vm822, 0.0
    %s828 = scalar_lea.vmem [#allocation3], 33
    %829 = vst.msk [vmem:[%s828] ss:$8 sm:$0x3] %vm822, 0.0
    %830 = vst.msk [vmem:[%s828] ss:$8 sm:$0x0] %vm822, 0.0
    %s831 = scalar_lea.vmem [#allocation3], 81
    %832 = vst.msk [vmem:[%s831] ss:$8 sm:$0x3] %vm822, 0.0
    %833 = vst.msk [vmem:[%s831] ss:$8 sm:$0x0] %vm822, 0.0
    %v842 = vrot.slane %v813, 7
    %v843 = vrot.slane %v814, 7
    %v844 = vrot.slane %v815, 7
    %v845 = vsel %vm137, %v842, %v844
    %v846 = vrot.slane %v816, 7
    %v847 = vsel %vm137, %v843, %v846
    %v848 = vrot.slane %v817, 7
    %v849 = vrot.slane %v818, 7
    %v850 = vrot.slane %v819, 7
    %v851 = vsel %vm137, %v848, %v850
    %v852 = vrot.slane %v820, 7
    %v853 = vsel %vm137, %v849, %v852
    %866 = vst [vmem:[#allocation3] sm:$0xfe] %v842
    %867 = vst [vmem:[#allocation3 + $0x8] sm:$0xfe] %v843
    %868 = vst [vmem:[#allocation3 + $0x10] sm:$0xff] %v845
    %869 = vst [vmem:[#allocation3 + $0x18] sm:$0xff] %v847
    %870 = vst [vmem:[#allocation3 + $0x20] sm:$0x1] %v844
    %871 = vst [vmem:[#allocation3 + $0x28] sm:$0x1] %v846
    %872 = vst [vmem:[#allocation3 + $0x30] sm:$0xfe] %v848
    %873 = vst [vmem:[#allocation3 + $0x38] sm:$0xfe] %v849
    %874 = vst [vmem:[#allocation3 + $0x40] sm:$0xff] %v851
    %875 = vst [vmem:[#allocation3 + $0x48] sm:$0xff] %v853
    %876 = vst [vmem:[#allocation3 + $0x50] sm:$0x1] %v850
    %877 = vst [vmem:[#allocation3 + $0x58] sm:$0x1] %v852
    %v878 = vld [vmem:[#allocation3] sm:$0xff]
    %v879 = vld [vmem:[#allocation3 + $0x8] sm:$0xff]
    %v880 = vld [vmem:[#allocation3 + $0x10] sm:$0xff]
    %v881 = vld [vmem:[#allocation3 + $0x18] sm:$0xff]
    %v882 = vld [vmem:[#allocation3 + $0x30] sm:$0xff]
    %v883 = vld [vmem:[#allocation3 + $0x38] sm:$0xff]
    %v884 = vld [vmem:[#allocation3 + $0x40] sm:$0xff]
    %v885 = vld [vmem:[#allocation3 + $0x48] sm:$0xff]
    %v886 = vld [vmem:[#allocation9] sm:$0xff]
    %v887 = vld [vmem:[#allocation9 + $0x8] sm:$0xff]
    %v888 = vld [vmem:[#allocation9 + $0x10] sm:$0xff]
    %v889 = vld [vmem:[#allocation9 + $0x18] sm:$0xff]
    %v890 = vld [vmem:[#allocation9 + $0x20] sm:$0xff]
    %v891 = vld [vmem:[#allocation9 + $0x28] sm:$0xff]
    %v892 = vld [vmem:[#allocation9 + $0x30] sm:$0xff]
    %v893 = vld [vmem:[#allocation9 + $0x38] sm:$0xff]
    %v894 = vld [vmem:[#allocation9 + $0x40] sm:$0xff]
    %v895 = vld [vmem:[#allocation9 + $0x48] sm:$0xff]
    %v896 = vld [vmem:[#allocation9 + $0x50] sm:$0xff]
    %v897 = vld [vmem:[#allocation9 + $0x58] sm:$0xff]
    %v898 = vld [vmem:[#allocation9 + $0x60] sm:$0xff]
    %v899 = vld [vmem:[#allocation9 + $0x68] sm:$0xff]
    %v900 = vld [vmem:[#allocation9 + $0x70] sm:$0xff]
    %v901 = vld [vmem:[#allocation9 + $0x78] sm:$0xff]
    %v902 = vld [vmem:[#allocation9 + $0x80] sm:$0xff]
    %v903 = vld [vmem:[#allocation9 + $0x88] sm:$0xff]
    %v904 = vld [vmem:[#allocation9 + $0x90] sm:$0xff]
    %v905 = vld [vmem:[#allocation9 + $0x98] sm:$0xff]
    %v906 = vld [vmem:[#allocation9 + $0xa0] sm:$0xff]
    %v907 = vld [vmem:[#allocation9 + $0xa8] sm:$0xff]
    %v908 = vld [vmem:[#allocation9 + $0xb0] sm:$0xff]
    %v909 = vld [vmem:[#allocation9 + $0xb8] sm:$0xff]
    %v910 = vld [vmem:[#allocation9 + $0xc0] sm:$0xff]
    %v911 = vld [vmem:[#allocation9 + $0xc8] sm:$0xff]
    %v912 = vld [vmem:[#allocation9 + $0xd0] sm:$0xff]
    %v913 = vld [vmem:[#allocation9 + $0xd8] sm:$0xff]
    %v914 = vld [vmem:[#allocation9 + $0xe0] sm:$0xff]
    %v915 = vld [vmem:[#allocation9 + $0xe8] sm:$0xff]
    %v916 = vld [vmem:[#allocation9 + $0xf0] sm:$0xff]
    %v917 = vld [vmem:[#allocation9 + $0xf8] sm:$0xff]
    %v918 = vld [vmem:[#allocation9 + $0x100] sm:$0xff]
    %v919 = vld [vmem:[#allocation9 + $0x108] sm:$0xff]
    %v920 = vld [vmem:[#allocation9 + $0x110] sm:$0xff]
    %v921 = vld [vmem:[#allocation9 + $0x118] sm:$0xff]
    %v922 = vld [vmem:[#allocation9 + $0x120] sm:$0xff]
    %v923 = vld [vmem:[#allocation9 + $0x128] sm:$0xff]
    %v924 = vld [vmem:[#allocation9 + $0x130] sm:$0xff]
    %v925 = vld [vmem:[#allocation9 + $0x138] sm:$0xff]
    %v926 = vld [vmem:[#allocation9 + $0x140] sm:$0xff]
    %v927 = vld [vmem:[#allocation9 + $0x148] sm:$0xff]
    %v928 = vld [vmem:[#allocation9 + $0x150] sm:$0xff]
    %v929 = vld [vmem:[#allocation9 + $0x158] sm:$0xff]
    %v930 = vld [vmem:[#allocation9 + $0x160] sm:$0xff]
    %v931 = vld [vmem:[#allocation9 + $0x168] sm:$0xff]
    %v932 = vld [vmem:[#allocation9 + $0x170] sm:$0xff]
    %v933 = vld [vmem:[#allocation9 + $0x178] sm:$0xff]
    %v934 = vld [vmem:[#allocation9 + $0x180] sm:$0xff]
    %v935 = vld [vmem:[#allocation9 + $0x188] sm:$0xff]
    %v936 = vld [vmem:[#allocation9 + $0x190] sm:$0xff]
    %v937 = vld [vmem:[#allocation9 + $0x198] sm:$0xff]
    %v938 = vld [vmem:[#allocation9 + $0x1a0] sm:$0xff]
    %v939 = vld [vmem:[#allocation9 + $0x1a8] sm:$0xff]
    %v940 = vld [vmem:[#allocation9 + $0x1b0] sm:$0xff]
    %v941 = vld [vmem:[#allocation9 + $0x1b8] sm:$0xff]
    %v942 = vld [vmem:[#allocation9 + $0x1c0] sm:$0xff]
    %v943 = vld [vmem:[#allocation9 + $0x1c8] sm:$0xff]
    %v944 = vld [vmem:[#allocation9 + $0x1d0] sm:$0xff]
    %v945 = vld [vmem:[#allocation9 + $0x1d8] sm:$0xff]
    %v946 = vld [vmem:[#allocation9 + $0x1e0] sm:$0xff]
    %v947 = vld [vmem:[#allocation9 + $0x1e8] sm:$0xff]
    %v948 = vld [vmem:[#allocation9 + $0x1f0] sm:$0xff]
    %v949 = vld [vmem:[#allocation9 + $0x1f8] sm:$0xff]
    %v950 = vld [vmem:[#allocation9 + $0x200] sm:$0xff]
    %v951 = vld [vmem:[#allocation9 + $0x208] sm:$0xff]
    %v952 = vld [vmem:[#allocation9 + $0x210] sm:$0xff]
    %v953 = vld [vmem:[#allocation9 + $0x218] sm:$0xff]
    %v954 = vld [vmem:[#allocation9 + $0x220] sm:$0xff]
    %v955 = vld [vmem:[#allocation9 + $0x228] sm:$0xff]
    %v956 = vld [vmem:[#allocation9 + $0x230] sm:$0xff]
    %v957 = vld [vmem:[#allocation9 + $0x238] sm:$0xff]
    %v958 = vld [vmem:[#allocation9 + $0x240] sm:$0xff]
    %v959 = vld [vmem:[#allocation9 + $0x248] sm:$0xff]
    %v960 = vld [vmem:[#allocation9 + $0x250] sm:$0xff]
    %v961 = vld [vmem:[#allocation9 + $0x258] sm:$0xff]
    %v962 = vld [vmem:[#allocation9 + $0x260] sm:$0xff]
    %v963 = vld [vmem:[#allocation9 + $0x268] sm:$0xff]
    %v964 = vld [vmem:[#allocation9 + $0x270] sm:$0xff]
    %v965 = vld [vmem:[#allocation9 + $0x278] sm:$0xff]
    %v966 = vld [vmem:[#allocation9 + $0x280] sm:$0xff]
    %v967 = vld [vmem:[#allocation9 + $0x288] sm:$0xff]
    %v968 = vld [vmem:[#allocation9 + $0x290] sm:$0xff]
    %v969 = vld [vmem:[#allocation9 + $0x298] sm:$0xff]
    %v970 = vld [vmem:[#allocation9 + $0x2a0] sm:$0xff]
    %v971 = vld [vmem:[#allocation9 + $0x2a8] sm:$0xff]
    %v972 = vld [vmem:[#allocation9 + $0x2b0] sm:$0xff]
    %v973 = vld [vmem:[#allocation9 + $0x2b8] sm:$0xff]
    %v974 = vld [vmem:[#allocation9 + $0x2c0] sm:$0xff]
    %v975 = vld [vmem:[#allocation9 + $0x2c8] sm:$0xff]
    %v976 = vld [vmem:[#allocation9 + $0x2d0] sm:$0xff]
    %v977 = vld [vmem:[#allocation9 + $0x2d8] sm:$0xff]
    %v978 = vld [vmem:[#allocation9 + $0x2e0] sm:$0xff]
    %v979 = vld [vmem:[#allocation9 + $0x2e8] sm:$0xff]
    %v980 = vld [vmem:[#allocation9 + $0x2f0] sm:$0xff]
    %v981 = vld [vmem:[#allocation9 + $0x2f8] sm:$0xff]
    %v982 = vld [vmem:[#allocation9 + $0x300] sm:$0xff]
    %v983 = vld [vmem:[#allocation9 + $0x308] sm:$0xff]
    %v984 = vld [vmem:[#allocation9 + $0x310] sm:$0xff]
    %v985 = vld [vmem:[#allocation9 + $0x318] sm:$0xff]
    %v986 = vld [vmem:[#allocation9 + $0x320] sm:$0xff]
    %v987 = vld [vmem:[#allocation9 + $0x328] sm:$0xff]
    %v988 = vld [vmem:[#allocation9 + $0x330] sm:$0xff]
    %v989 = vld [vmem:[#allocation9 + $0x338] sm:$0xff]
    %v990 = vld [vmem:[#allocation9 + $0x340] sm:$0xff]
    %v991 = vld [vmem:[#allocation9 + $0x348] sm:$0xff]
    %v992 = vld [vmem:[#allocation9 + $0x350] sm:$0xff]
    %v993 = vld [vmem:[#allocation9 + $0x358] sm:$0xff]
    %v994 = vld [vmem:[#allocation9 + $0x360] sm:$0xff]
    %v995 = vld [vmem:[#allocation9 + $0x368] sm:$0xff]
    %v996 = vld [vmem:[#allocation9 + $0x370] sm:$0xff]
    %v997 = vld [vmem:[#allocation9 + $0x378] sm:$0xff]
    %v998 = vld [vmem:[#allocation9 + $0x380] sm:$0xff]
    %v999 = vld [vmem:[#allocation9 + $0x388] sm:$0xff]
    %v1000 = vld [vmem:[#allocation9 + $0x390] sm:$0xff]
    %v1001 = vld [vmem:[#allocation9 + $0x398] sm:$0xff]
    %v1002 = vld [vmem:[#allocation9 + $0x3a0] sm:$0xff]
    %v1003 = vld [vmem:[#allocation9 + $0x3a8] sm:$0xff]
    %v1004 = vld [vmem:[#allocation9 + $0x3b0] sm:$0xff]
    %v1005 = vld [vmem:[#allocation9 + $0x3b8] sm:$0xff]
    %v1006 = vld [vmem:[#allocation9 + $0x3c0] sm:$0xff]
    %v1007 = vld [vmem:[#allocation9 + $0x3c8] sm:$0xff]
    %v1008 = vld [vmem:[#allocation9 + $0x3d0] sm:$0xff]
    %v1009 = vld [vmem:[#allocation9 + $0x3d8] sm:$0xff]
    %v1010 = vld [vmem:[#allocation9 + $0x3e0] sm:$0xff]
    %v1011 = vld [vmem:[#allocation9 + $0x3e8] sm:$0xff]
    %v1012 = vld [vmem:[#allocation9 + $0x3f0] sm:$0xff]
    %v1013 = vld [vmem:[#allocation9 + $0x3f8] sm:$0xff]
    %v1014 = vld [vmem:[#allocation3] sm:$0xfe]
    %v1015 = vld [vmem:[#allocation3 + $0x8] sm:$0xfe]
    %v1016 = vld [vmem:[#allocation3 + $0x20] sm:$0x1]
    %v1017 = vld [vmem:[#allocation3 + $0x28] sm:$0x1]
    %v1018 = vld [vmem:[#allocation3 + $0x30] sm:$0xfe]
    %v1019 = vld [vmem:[#allocation3 + $0x38] sm:$0xfe]
    %v1020 = vld [vmem:[#allocation3 + $0x50] sm:$0x1]
    %v1021 = vld [vmem:[#allocation3 + $0x58] sm:$0x1]
    %v1034 = vrot.slane %v1014, 1
    %v1035 = vrot.slane %v880, 1
    %v1036 = vsel %vm253, %v1034, %v1035
    %v1037 = vrot.slane %v1015, 1
    %v1038 = vrot.slane %v881, 1
    %v1039 = vsel %vm253, %v1037, %v1038
    %v1040 = vrot.slane %v1016, 1
    %v1041 = vsel %vm253, %v1035, %v1040
    %v1042 = vrot.slane %v1017, 1
    %v1043 = vsel %vm253, %v1038, %v1042
    %v1044 = vrot.slane %v1018, 1
    %v1045 = vrot.slane %v884, 1
    %v1046 = vsel %vm253, %v1044, %v1045
    %v1047 = vrot.slane %v1019, 1
    %v1048 = vrot.slane %v885, 1
    %v1049 = vsel %vm253, %v1047, %v1048
    %v1050 = vrot.slane %v1020, 1
    %v1051 = vsel %vm253, %v1045, %v1050
    %v1052 = vrot.slane %v1021, 1
    %v1053 = vsel %vm253, %v1048, %v1052
    %s1062 = scalar_lea.vmem [#allocation9], 1024
    %v1063 = vld [vmem:[%s1062] sm:$0xff]
    %v1064 = vld [vmem:[%s1062 + $0x8] sm:$0xff]
    %v1065 = vld [vmem:[%s1062 + $0x10] sm:$0xff]
    %v1066 = vld [vmem:[%s1062 + $0x18] sm:$0xff]
    %v1067 = vld [vmem:[%s1062 + $0x20] sm:$0xff]
    %v1068 = vld [vmem:[%s1062 + $0x28] sm:$0xff]
    %v1069 = vld [vmem:[%s1062 + $0x30] sm:$0xff]
    %v1070 = vld [vmem:[%s1062 + $0x38] sm:$0xff]
    %v1071 = vld [vmem:[%s1062 + $0x40] sm:$0xff]
    %v1072 = vld [vmem:[%s1062 + $0x48] sm:$0xff]
    %v1073 = vld [vmem:[%s1062 + $0x50] sm:$0xff]
    %v1074 = vld [vmem:[%s1062 + $0x58] sm:$0xff]
    %v1075 = vld [vmem:[%s1062 + $0x60] sm:$0xff]
    %v1076 = vld [vmem:[%s1062 + $0x68] sm:$0xff]
    %v1077 = vld [vmem:[%s1062 + $0x70] sm:$0xff]
    %v1078 = vld [vmem:[%s1062 + $0x78] sm:$0xff]
    %v1079 = vld [vmem:[%s1062 + $0x80] sm:$0xff]
    %v1080 = vld [vmem:[%s1062 + $0x88] sm:$0xff]
    %v1081 = vld [vmem:[%s1062 + $0x90] sm:$0xff]
    %v1082 = vld [vmem:[%s1062 + $0x98] sm:$0xff]
    %v1083 = vld [vmem:[%s1062 + $0xa0] sm:$0xff]
    %v1084 = vld [vmem:[%s1062 + $0xa8] sm:$0xff]
    %v1085 = vld [vmem:[%s1062 + $0xb0] sm:$0xff]
    %v1086 = vld [vmem:[%s1062 + $0xb8] sm:$0xff]
    %v1087 = vld [vmem:[%s1062 + $0xc0] sm:$0xff]
    %v1088 = vld [vmem:[%s1062 + $0xc8] sm:$0xff]
    %v1089 = vld [vmem:[%s1062 + $0xd0] sm:$0xff]
    %v1090 = vld [vmem:[%s1062 + $0xd8] sm:$0xff]
    %v1091 = vld [vmem:[%s1062 + $0xe0] sm:$0xff]
    %v1092 = vld [vmem:[%s1062 + $0xe8] sm:$0xff]
    %v1093 = vld [vmem:[%s1062 + $0xf0] sm:$0xff]
    %v1094 = vld [vmem:[%s1062 + $0xf8] sm:$0xff]
    %v1095 = vld [vmem:[%s1062 + $0x100] sm:$0xff]
    %v1096 = vld [vmem:[%s1062 + $0x108] sm:$0xff]
    %v1097 = vld [vmem:[%s1062 + $0x110] sm:$0xff]
    %v1098 = vld [vmem:[%s1062 + $0x118] sm:$0xff]
    %v1099 = vld [vmem:[%s1062 + $0x120] sm:$0xff]
    %v1100 = vld [vmem:[%s1062 + $0x128] sm:$0xff]
    %v1101 = vld [vmem:[%s1062 + $0x130] sm:$0xff]
    %v1102 = vld [vmem:[%s1062 + $0x138] sm:$0xff]
    %v1103 = vld [vmem:[%s1062 + $0x140] sm:$0xff]
    %v1104 = vld [vmem:[%s1062 + $0x148] sm:$0xff]
    %v1105 = vld [vmem:[%s1062 + $0x150] sm:$0xff]
    %v1106 = vld [vmem:[%s1062 + $0x158] sm:$0xff]
    %v1107 = vld [vmem:[%s1062 + $0x160] sm:$0xff]
    %v1108 = vld [vmem:[%s1062 + $0x168] sm:$0xff]
    %v1109 = vld [vmem:[%s1062 + $0x170] sm:$0xff]
    %v1110 = vld [vmem:[%s1062 + $0x178] sm:$0xff]
    %v1111 = vld [vmem:[%s1062 + $0x180] sm:$0xff]
    %v1112 = vld [vmem:[%s1062 + $0x188] sm:$0xff]
    %v1113 = vld [vmem:[%s1062 + $0x190] sm:$0xff]
    %v1114 = vld [vmem:[%s1062 + $0x198] sm:$0xff]
    %v1115 = vld [vmem:[%s1062 + $0x1a0] sm:$0xff]
    %v1116 = vld [vmem:[%s1062 + $0x1a8] sm:$0xff]
    %v1117 = vld [vmem:[%s1062 + $0x1b0] sm:$0xff]
    %v1118 = vld [vmem:[%s1062 + $0x1b8] sm:$0xff]
    %v1119 = vld [vmem:[%s1062 + $0x1c0] sm:$0xff]
    %v1120 = vld [vmem:[%s1062 + $0x1c8] sm:$0xff]
    %v1121 = vld [vmem:[%s1062 + $0x1d0] sm:$0xff]
    %v1122 = vld [vmem:[%s1062 + $0x1d8] sm:$0xff]
    %v1123 = vld [vmem:[%s1062 + $0x1e0] sm:$0xff]
    %v1124 = vld [vmem:[%s1062 + $0x1e8] sm:$0xff]
    %v1125 = vld [vmem:[%s1062 + $0x1f0] sm:$0xff]
    %v1126 = vld [vmem:[%s1062 + $0x1f8] sm:$0xff]
    %v1127 = vld [vmem:[%s1062 + $0x200] sm:$0xff]
    %v1128 = vld [vmem:[%s1062 + $0x208] sm:$0xff]
    %v1129 = vld [vmem:[%s1062 + $0x210] sm:$0xff]
    %v1130 = vld [vmem:[%s1062 + $0x218] sm:$0xff]
    %v1131 = vld [vmem:[%s1062 + $0x220] sm:$0xff]
    %v1132 = vld [vmem:[%s1062 + $0x228] sm:$0xff]
    %v1133 = vld [vmem:[%s1062 + $0x230] sm:$0xff]
    %v1134 = vld [vmem:[%s1062 + $0x238] sm:$0xff]
    %v1135 = vld [vmem:[%s1062 + $0x240] sm:$0xff]
    %v1136 = vld [vmem:[%s1062 + $0x248] sm:$0xff]
    %v1137 = vld [vmem:[%s1062 + $0x250] sm:$0xff]
    %v1138 = vld [vmem:[%s1062 + $0x258] sm:$0xff]
    %v1139 = vld [vmem:[%s1062 + $0x260] sm:$0xff]
    %v1140 = vld [vmem:[%s1062 + $0x268] sm:$0xff]
    %v1141 = vld [vmem:[%s1062 + $0x270] sm:$0xff]
    %v1142 = vld [vmem:[%s1062 + $0x278] sm:$0xff]
    %v1143 = vld [vmem:[%s1062 + $0x280] sm:$0xff]
    %v1144 = vld [vmem:[%s1062 + $0x288] sm:$0xff]
    %v1145 = vld [vmem:[%s1062 + $0x290] sm:$0xff]
    %v1146 = vld [vmem:[%s1062 + $0x298] sm:$0xff]
    %v1147 = vld [vmem:[%s1062 + $0x2a0] sm:$0xff]
    %v1148 = vld [vmem:[%s1062 + $0x2a8] sm:$0xff]
    %v1149 = vld [vmem:[%s1062 + $0x2b0] sm:$0xff]
    %v1150 = vld [vmem:[%s1062 + $0x2b8] sm:$0xff]
    %v1151 = vld [vmem:[%s1062 + $0x2c0] sm:$0xff]
    %v1152 = vld [vmem:[%s1062 + $0x2c8] sm:$0xff]
    %v1153 = vld [vmem:[%s1062 + $0x2d0] sm:$0xff]
    %v1154 = vld [vmem:[%s1062 + $0x2d8] sm:$0xff]
    %v1155 = vld [vmem:[%s1062 + $0x2e0] sm:$0xff]
    %v1156 = vld [vmem:[%s1062 + $0x2e8] sm:$0xff]
    %v1157 = vld [vmem:[%s1062 + $0x2f0] sm:$0xff]
    %v1158 = vld [vmem:[%s1062 + $0x2f8] sm:$0xff]
    %v1159 = vld [vmem:[%s1062 + $0x300] sm:$0xff]
    %v1160 = vld [vmem:[%s1062 + $0x308] sm:$0xff]
    %v1161 = vld [vmem:[%s1062 + $0x310] sm:$0xff]
    %v1162 = vld [vmem:[%s1062 + $0x318] sm:$0xff]
    %v1163 = vld [vmem:[%s1062 + $0x320] sm:$0xff]
    %v1164 = vld [vmem:[%s1062 + $0x328] sm:$0xff]
    %v1165 = vld [vmem:[%s1062 + $0x330] sm:$0xff]
    %v1166 = vld [vmem:[%s1062 + $0x338] sm:$0xff]
    %v1167 = vld [vmem:[%s1062 + $0x340] sm:$0xff]
    %v1168 = vld [vmem:[%s1062 + $0x348] sm:$0xff]
    %v1169 = vld [vmem:[%s1062 + $0x350] sm:$0xff]
    %v1170 = vld [vmem:[%s1062 + $0x358] sm:$0xff]
    %v1171 = vld [vmem:[%s1062 + $0x360] sm:$0xff]
    %v1172 = vld [vmem:[%s1062 + $0x368] sm:$0xff]
    %v1173 = vld [vmem:[%s1062 + $0x370] sm:$0xff]
    %v1174 = vld [vmem:[%s1062 + $0x378] sm:$0xff]
    %v1175 = vld [vmem:[%s1062 + $0x380] sm:$0xff]
    %v1176 = vld [vmem:[%s1062 + $0x388] sm:$0xff]
    %v1177 = vld [vmem:[%s1062 + $0x390] sm:$0xff]
    %v1178 = vld [vmem:[%s1062 + $0x398] sm:$0xff]
    %v1179 = vld [vmem:[%s1062 + $0x3a0] sm:$0xff]
    %v1180 = vld [vmem:[%s1062 + $0x3a8] sm:$0xff]
    %v1181 = vld [vmem:[%s1062 + $0x3b0] sm:$0xff]
    %v1182 = vld [vmem:[%s1062 + $0x3b8] sm:$0xff]
    %v1183 = vld [vmem:[%s1062 + $0x3c0] sm:$0xff]
    %v1184 = vld [vmem:[%s1062 + $0x3c8] sm:$0xff]
    %v1185 = vld [vmem:[%s1062 + $0x3d0] sm:$0xff]
    %v1186 = vld [vmem:[%s1062 + $0x3d8] sm:$0xff]
    %v1187 = vld [vmem:[%s1062 + $0x3e0] sm:$0xff]
    %v1188 = vld [vmem:[%s1062 + $0x3e8] sm:$0xff]
    %v1189 = vld [vmem:[%s1062 + $0x3f0] sm:$0xff]
    %v1190 = vld [vmem:[%s1062 + $0x3f8] sm:$0xff]
    %1191 = vmatpush.msra.mxu0 %v1123
    %1192 = vmatpush.msra.mxu0 %v1119
    %1193 = vmatpush.msra.mxu0 %v1115
    %1194 = vmatpush.msra.mxu0 %v1111
    %1195 = vmatpush.msra.mxu0 %v1107
    %1196 = vmatpush.msra.mxu0 %v1103
    %1197 = vmatpush.msra.mxu0 %v1099
    %1198 = vmatpush.msra.mxu0 %v1095
    %1199 = vmatpush.msra.mxu0 %v1091
    %1200 = vmatpush.msra.mxu0 %v1087
    %1201 = vmatpush.msra.mxu0 %v1083
    %1202 = vmatpush.msra.mxu0 %v1079
    %1203 = vmatpush.msra.mxu0 %v1075
    %1204 = vmatpush.msra.mxu0 %v1071
    %1205 = vmatpush.msra.mxu0 %v1067
    %1206 = vmatpush.msra.mxu0 %v1063
    %1207 = vmatmul.f32.gmra.mxu0 %v1036
    %v1208 = vpop.f32.mrf.mxu0
    %v1209 = vadd.f32 0.0, %v1208
    %1210 = vmatmul.f32.gmra.mxu0 %v1041
    %v1211 = vpop.f32.mrf.mxu0
    %v1212 = vadd.f32 0.0, %v1211
    %1213 = vmatmul.f32.gmra.mxu0 %v1046
    %v1214 = vpop.f32.mrf.mxu0
    %v1215 = vadd.f32 0.0, %v1214
    %1216 = vmatmul.f32.gmra.mxu0 %v1051
    %v1217 = vpop.f32.mrf.mxu0
    %v1218 = vadd.f32 0.0, %v1217
    %1219 = vdwg.mxu0
    %1220 = vmatpush.msra.mxu0 %v1187
    %1221 = vmatpush.msra.mxu0 %v1183
    %1222 = vmatpush.msra.mxu0 %v1179
    %1223 = vmatpush.msra.mxu0 %v1175
    %1224 = vmatpush.msra.mxu0 %v1171
    %1225 = vmatpush.msra.mxu0 %v1167
    %1226 = vmatpush.msra.mxu0 %v1163
    %1227 = vmatpush.msra.mxu0 %v1159
    %1228 = vmatpush.msra.mxu0 %v1155
    %1229 = vmatpush.msra.mxu0 %v1151
    %1230 = vmatpush.msra.mxu0 %v1147
    %1231 = vmatpush.msra.mxu0 %v1143
    %1232 = vmatpush.msra.mxu0 %v1139
    %1233 = vmatpush.msra.mxu0 %v1135
    %1234 = vmatpush.msra.mxu0 %v1131
    %1235 = vmatpush.msra.mxu0 %v1127
    %1236 = vmatmul.f32.gmra.mxu0 %v1039
    %v1237 = vpop.f32.mrf.mxu0
    %v1238 = vadd.f32 %v1209, %v1237
    %1239 = vmatmul.f32.gmra.mxu0 %v1043
    %v1240 = vpop.f32.mrf.mxu0
    %v1241 = vadd.f32 %v1212, %v1240
    %1242 = vmatmul.f32.gmra.mxu0 %v1049
    %v1243 = vpop.f32.mrf.mxu0
    %v1244 = vadd.f32 %v1215, %v1243
    %1245 = vmatmul.f32.gmra.mxu0 %v1053
    %v1246 = vpop.f32.mrf.mxu0
    %v1247 = vadd.f32 %v1218, %v1246
    %1248 = vdwg.mxu0
    %1249 = vmatpush.msra.mxu0 %v1124
    %1250 = vmatpush.msra.mxu0 %v1120
    %1251 = vmatpush.msra.mxu0 %v1116
    %1252 = vmatpush.msra.mxu0 %v1112
    %1253 = vmatpush.msra.mxu0 %v1108
    %1254 = vmatpush.msra.mxu0 %v1104
    %1255 = vmatpush.msra.mxu0 %v1100
    %1256 = vmatpush.msra.mxu0 %v1096
    %1257 = vmatpush.msra.mxu0 %v1092
    %1258 = vmatpush.msra.mxu0 %v1088
    %1259 = vmatpush.msra.mxu0 %v1084
    %1260 = vmatpush.msra.mxu0 %v1080
    %1261 = vmatpush.msra.mxu0 %v1076
    %1262 = vmatpush.msra.mxu0 %v1072
    %1263 = vmatpush.msra.mxu0 %v1068
    %1264 = vmatpush.msra.mxu0 %v1064
    %1265 = vmatmul.f32.gmra.mxu0 %v1036
    %v1266 = vpop.f32.mrf.mxu0
    %v1267 = vadd.f32 0.0, %v1266
    %1268 = vmatmul.f32.gmra.mxu0 %v1041
    %v1269 = vpop.f32.mrf.mxu0
    %v1270 = vadd.f32 0.0, %v1269
    %1271 = vmatmul.f32.gmra.mxu0 %v1046
    %v1272 = vpop.f32.mrf.mxu0
    %v1273 = vadd.f32 0.0, %v1272
    %1274 = vmatmul.f32.gmra.mxu0 %v1051
    %v1275 = vpop.f32.mrf.mxu0
    %v1276 = vadd.f32 0.0, %v1275
    %1277 = vdwg.mxu0
    %1278 = vmatpush.msra.mxu0 %v1188
    %1279 = vmatpush.msra.mxu0 %v1184
    %1280 = vmatpush.msra.mxu0 %v1180
    %1281 = vmatpush.msra.mxu0 %v1176
    %1282 = vmatpush.msra.mxu0 %v1172
    %1283 = vmatpush.msra.mxu0 %v1168
    %1284 = vmatpush.msra.mxu0 %v1164
    %1285 = vmatpush.msra.mxu0 %v1160
    %1286 = vmatpush.msra.mxu0 %v1156
    %1287 = vmatpush.msra.mxu0 %v1152
    %1288 = vmatpush.msra.mxu0 %v1148
    %1289 = vmatpush.msra.mxu0 %v1144
    %1290 = vmatpush.msra.mxu0 %v1140
    %1291 = vmatpush.msra.mxu0 %v1136
    %1292 = vmatpush.msra.mxu0 %v1132
    %1293 = vmatpush.msra.mxu0 %v1128
    %1294 = vmatmul.f32.gmra.mxu0 %v1039
    %v1295 = vpop.f32.mrf.mxu0
    %v1296 = vadd.f32 %v1267, %v1295
    %1297 = vmatmul.f32.gmra.mxu0 %v1043
    %v1298 = vpop.f32.mrf.mxu0
    %v1299 = vadd.f32 %v1270, %v1298
    %1300 = vmatmul.f32.gmra.mxu0 %v1049
    %v1301 = vpop.f32.mrf.mxu0
    %v1302 = vadd.f32 %v1273, %v1301
    %1303 = vmatmul.f32.gmra.mxu0 %v1053
    %v1304 = vpop.f32.mrf.mxu0
    %v1305 = vadd.f32 %v1276, %v1304
    %1306 = vdwg.mxu0
    %1307 = vmatpush.msra.mxu0 %v1125
    %1308 = vmatpush.msra.mxu0 %v1121
    %1309 = vmatpush.msra.mxu0 %v1117
    %1310 = vmatpush.msra.mxu0 %v1113
    %1311 = vmatpush.msra.mxu0 %v1109
    %1312 = vmatpush.msra.mxu0 %v1105
    %1313 = vmatpush.msra.mxu0 %v1101
    %1314 = vmatpush.msra.mxu0 %v1097
    %1315 = vmatpush.msra.mxu0 %v1093
    %1316 = vmatpush.msra.mxu0 %v1089
    %1317 = vmatpush.msra.mxu0 %v1085
    %1318 = vmatpush.msra.mxu0 %v1081
    %1319 = vmatpush.msra.mxu0 %v1077
    %1320 = vmatpush.msra.mxu0 %v1073
    %1321 = vmatpush.msra.mxu0 %v1069
    %1322 = vmatpush.msra.mxu0 %v1065
    %1323 = vmatmul.f32.gmra.mxu0 %v1036
    %v1324 = vpop.f32.mrf.mxu0
    %v1325 = vadd.f32 0.0, %v1324
    %1326 = vmatmul.f32.gmra.mxu0 %v1041
    %v1327 = vpop.f32.mrf.mxu0
    %v1328 = vadd.f32 0.0, %v1327
    %1329 = vmatmul.f32.gmra.mxu0 %v1046
    %v1330 = vpop.f32.mrf.mxu0
    %v1331 = vadd.f32 0.0, %v1330
    %1332 = vmatmul.f32.gmra.mxu0 %v1051
    %v1333 = vpop.f32.mrf.mxu0
    %v1334 = vadd.f32 0.0, %v1333
    %1335 = vdwg.mxu0
    %1336 = vmatpush.msra.mxu0 %v1189
    %1337 = vmatpush.msra.mxu0 %v1185
    %1338 = vmatpush.msra.mxu0 %v1181
    %1339 = vmatpush.msra.mxu0 %v1177
    %1340 = vmatpush.msra.mxu0 %v1173
    %1341 = vmatpush.msra.mxu0 %v1169
    %1342 = vmatpush.msra.mxu0 %v1165
    %1343 = vmatpush.msra.mxu0 %v1161
    %1344 = vmatpush.msra.mxu0 %v1157
    %1345 = vmatpush.msra.mxu0 %v1153
    %1346 = vmatpush.msra.mxu0 %v1149
    %1347 = vmatpush.msra.mxu0 %v1145
    %1348 = vmatpush.msra.mxu0 %v1141
    %1349 = vmatpush.msra.mxu0 %v1137
    %1350 = vmatpush.msra.mxu0 %v1133
    %1351 = vmatpush.msra.mxu0 %v1129
    %1352 = vmatmul.f32.gmra.mxu0 %v1039
    %v1353 = vpop.f32.mrf.mxu0
    %v1354 = vadd.f32 %v1325, %v1353
    %1355 = vmatmul.f32.gmra.mxu0 %v1043
    %v1356 = vpop.f32.mrf.mxu0
    %v1357 = vadd.f32 %v1328, %v1356
    %1358 = vmatmul.f32.gmra.mxu0 %v1049
    %v1359 = vpop.f32.mrf.mxu0
    %v1360 = vadd.f32 %v1331, %v1359
    %1361 = vmatmul.f32.gmra.mxu0 %v1053
    %v1362 = vpop.f32.mrf.mxu0
    %v1363 = vadd.f32 %v1334, %v1362
    %1364 = vdwg.mxu0
    %1365 = vmatpush.msra.mxu0 %v1126
    %1366 = vmatpush.msra.mxu0 %v1122
    %1367 = vmatpush.msra.mxu0 %v1118
    %1368 = vmatpush.msra.mxu0 %v1114
    %1369 = vmatpush.msra.mxu0 %v1110
    %1370 = vmatpush.msra.mxu0 %v1106
    %1371 = vmatpush.msra.mxu0 %v1102
    %1372 = vmatpush.msra.mxu0 %v1098
    %1373 = vmatpush.msra.mxu0 %v1094
    %1374 = vmatpush.msra.mxu0 %v1090
    %1375 = vmatpush.msra.mxu0 %v1086
    %1376 = vmatpush.msra.mxu0 %v1082
    %1377 = vmatpush.msra.mxu0 %v1078
    %1378 = vmatpush.msra.mxu0 %v1074
    %1379 = vmatpush.msra.mxu0 %v1070
    %1380 = vmatpush.msra.mxu0 %v1066
    %1381 = vmatmul.f32.gmra.mxu0 %v1036
    %v1382 = vpop.f32.mrf.mxu0
    %v1383 = vadd.f32 0.0, %v1382
    %1384 = vmatmul.f32.gmra.mxu0 %v1041
    %v1385 = vpop.f32.mrf.mxu0
    %v1386 = vadd.f32 0.0, %v1385
    %1387 = vmatmul.f32.gmra.mxu0 %v1046
    %v1388 = vpop.f32.mrf.mxu0
    %v1389 = vadd.f32 0.0, %v1388
    %1390 = vmatmul.f32.gmra.mxu0 %v1051
    %v1391 = vpop.f32.mrf.mxu0
    %v1392 = vadd.f32 0.0, %v1391
    %1393 = vdwg.mxu0
    %1394 = vmatpush.msra.mxu0 %v1190
    %1395 = vmatpush.msra.mxu0 %v1186
    %1396 = vmatpush.msra.mxu0 %v1182
    %1397 = vmatpush.msra.mxu0 %v1178
    %1398 = vmatpush.msra.mxu0 %v1174
    %1399 = vmatpush.msra.mxu0 %v1170
    %1400 = vmatpush.msra.mxu0 %v1166
    %1401 = vmatpush.msra.mxu0 %v1162
    %1402 = vmatpush.msra.mxu0 %v1158
    %1403 = vmatpush.msra.mxu0 %v1154
    %1404 = vmatpush.msra.mxu0 %v1150
    %1405 = vmatpush.msra.mxu0 %v1146
    %1406 = vmatpush.msra.mxu0 %v1142
    %1407 = vmatpush.msra.mxu0 %v1138
    %1408 = vmatpush.msra.mxu0 %v1134
    %1409 = vmatpush.msra.mxu0 %v1130
    %1410 = vmatmul.f32.gmra.mxu0 %v1039
    %v1411 = vpop.f32.mrf.mxu0
    %v1412 = vadd.f32 %v1383, %v1411
    %1413 = vmatmul.f32.gmra.mxu0 %v1043
    %v1414 = vpop.f32.mrf.mxu0
    %v1415 = vadd.f32 %v1386, %v1414
    %1416 = vmatmul.f32.gmra.mxu0 %v1049
    %v1417 = vpop.f32.mrf.mxu0
    %v1418 = vadd.f32 %v1389, %v1417
    %1419 = vmatmul.f32.gmra.mxu0 %v1053
    %v1420 = vpop.f32.mrf.mxu0
    %v1421 = vadd.f32 %v1392, %v1420
    %1422 = vdwg.mxu0
    %1423 = vmatpush.msra.mxu0 %v946
    %1424 = vmatpush.msra.mxu0 %v942
    %1425 = vmatpush.msra.mxu0 %v938
    %1426 = vmatpush.msra.mxu0 %v934
    %1427 = vmatpush.msra.mxu0 %v930
    %1428 = vmatpush.msra.mxu0 %v926
    %1429 = vmatpush.msra.mxu0 %v922
    %1430 = vmatpush.msra.mxu0 %v918
    %1431 = vmatpush.msra.mxu0 %v914
    %1432 = vmatpush.msra.mxu0 %v910
    %1433 = vmatpush.msra.mxu0 %v906
    %1434 = vmatpush.msra.mxu0 %v902
    %1435 = vmatpush.msra.mxu0 %v898
    %1436 = vmatpush.msra.mxu0 %v894
    %1437 = vmatpush.msra.mxu0 %v890
    %1438 = vmatpush.msra.mxu0 %v886
    %1439 = vmatmul.f32.gmra.mxu0 %v878
    %v1440 = vpop.f32.mrf.mxu0
    %v1441 = vadd.f32 %v1238, %v1440
    %1442 = vmatmul.f32.gmra.mxu0 %v880
    %v1443 = vpop.f32.mrf.mxu0
    %v1444 = vadd.f32 %v1241, %v1443
    %1445 = vmatmul.f32.gmra.mxu0 %v882
    %v1446 = vpop.f32.mrf.mxu0
    %v1447 = vadd.f32 %v1244, %v1446
    %1448 = vmatmul.f32.gmra.mxu0 %v884
    %v1449 = vpop.f32.mrf.mxu0
    %v1450 = vadd.f32 %v1247, %v1449
    %1451 = vdwg.mxu0
    %1452 = vmatpush.msra.mxu0 %v1010
    %1453 = vmatpush.msra.mxu0 %v1006
    %1454 = vmatpush.msra.mxu0 %v1002
    %1455 = vmatpush.msra.mxu0 %v998
    %1456 = vmatpush.msra.mxu0 %v994
    %1457 = vmatpush.msra.mxu0 %v990
    %1458 = vmatpush.msra.mxu0 %v986
    %1459 = vmatpush.msra.mxu0 %v982
    %1460 = vmatpush.msra.mxu0 %v978
    %1461 = vmatpush.msra.mxu0 %v974
    %1462 = vmatpush.msra.mxu0 %v970
    %1463 = vmatpush.msra.mxu0 %v966
    %1464 = vmatpush.msra.mxu0 %v962
    %1465 = vmatpush.msra.mxu0 %v958
    %1466 = vmatpush.msra.mxu0 %v954
    %1467 = vmatpush.msra.mxu0 %v950
    %1468 = vmatmul.f32.gmra.mxu0 %v879
    %v1469 = vpop.f32.mrf.mxu0
    %v1470 = vadd.f32 %v1441, %v1469
    %1471 = vmatmul.f32.gmra.mxu0 %v881
    %v1472 = vpop.f32.mrf.mxu0
    %v1473 = vadd.f32 %v1444, %v1472
    %1474 = vmatmul.f32.gmra.mxu0 %v883
    %v1475 = vpop.f32.mrf.mxu0
    %v1476 = vadd.f32 %v1447, %v1475
    %1477 = vmatmul.f32.gmra.mxu0 %v885
    %v1478 = vpop.f32.mrf.mxu0
    %v1479 = vadd.f32 %v1450, %v1478
    %1480 = vdwg.mxu0
    %1481 = vmatpush.msra.mxu0 %v947
    %1482 = vmatpush.msra.mxu0 %v943
    %1483 = vmatpush.msra.mxu0 %v939
    %1484 = vmatpush.msra.mxu0 %v935
    %1485 = vmatpush.msra.mxu0 %v931
    %1486 = vmatpush.msra.mxu0 %v927
    %1487 = vmatpush.msra.mxu0 %v923
    %1488 = vmatpush.msra.mxu0 %v919
    %1489 = vmatpush.msra.mxu0 %v915
    %1490 = vmatpush.msra.mxu0 %v911
    %1491 = vmatpush.msra.mxu0 %v907
    %1492 = vmatpush.msra.mxu0 %v903
    %1493 = vmatpush.msra.mxu0 %v899
    %1494 = vmatpush.msra.mxu0 %v895
    %1495 = vmatpush.msra.mxu0 %v891
    %1496 = vmatpush.msra.mxu0 %v887
    %1497 = vmatmul.f32.gmra.mxu0 %v878
    %v1498 = vpop.f32.mrf.mxu0
    %v1499 = vadd.f32 %v1296, %v1498
    %1500 = vmatmul.f32.gmra.mxu0 %v880
    %v1501 = vpop.f32.mrf.mxu0
    %v1502 = vadd.f32 %v1299, %v1501
    %1503 = vmatmul.f32.gmra.mxu0 %v882
    %v1504 = vpop.f32.mrf.mxu0
    %v1505 = vadd.f32 %v1302, %v1504
    %1506 = vmatmul.f32.gmra.mxu0 %v884
    %v1507 = vpop.f32.mrf.mxu0
    %v1508 = vadd.f32 %v1305, %v1507
    %1509 = vdwg.mxu0
    %1510 = vmatpush.msra.mxu0 %v1011
    %1511 = vmatpush.msra.mxu0 %v1007
    %1512 = vmatpush.msra.mxu0 %v1003
    %1513 = vmatpush.msra.mxu0 %v999
    %1514 = vmatpush.msra.mxu0 %v995
    %1515 = vmatpush.msra.mxu0 %v991
    %1516 = vmatpush.msra.mxu0 %v987
    %1517 = vmatpush.msra.mxu0 %v983
    %1518 = vmatpush.msra.mxu0 %v979
    %1519 = vmatpush.msra.mxu0 %v975
    %1520 = vmatpush.msra.mxu0 %v971
    %1521 = vmatpush.msra.mxu0 %v967
    %1522 = vmatpush.msra.mxu0 %v963
    %1523 = vmatpush.msra.mxu0 %v959
    %1524 = vmatpush.msra.mxu0 %v955
    %1525 = vmatpush.msra.mxu0 %v951
    %1526 = vmatmul.f32.gmra.mxu0 %v879
    %v1527 = vpop.f32.mrf.mxu0
    %v1528 = vadd.f32 %v1499, %v1527
    %1529 = vmatmul.f32.gmra.mxu0 %v881
    %v1530 = vpop.f32.mrf.mxu0
    %v1531 = vadd.f32 %v1502, %v1530
    %1532 = vmatmul.f32.gmra.mxu0 %v883
    %v1533 = vpop.f32.mrf.mxu0
    %v1534 = vadd.f32 %v1505, %v1533
    %1535 = vmatmul.f32.gmra.mxu0 %v885
    %v1536 = vpop.f32.mrf.mxu0
    %v1537 = vadd.f32 %v1508, %v1536
    %1538 = vdwg.mxu0
    %1539 = vmatpush.msra.mxu0 %v948
    %1540 = vmatpush.msra.mxu0 %v944
    %1541 = vmatpush.msra.mxu0 %v940
    %1542 = vmatpush.msra.mxu0 %v936
    %1543 = vmatpush.msra.mxu0 %v932
    %1544 = vmatpush.msra.mxu0 %v928
    %1545 = vmatpush.msra.mxu0 %v924
    %1546 = vmatpush.msra.mxu0 %v920
    %1547 = vmatpush.msra.mxu0 %v916
    %1548 = vmatpush.msra.mxu0 %v912
    %1549 = vmatpush.msra.mxu0 %v908
    %1550 = vmatpush.msra.mxu0 %v904
    %1551 = vmatpush.msra.mxu0 %v900
    %1552 = vmatpush.msra.mxu0 %v896
    %1553 = vmatpush.msra.mxu0 %v892
    %1554 = vmatpush.msra.mxu0 %v888
    %1555 = vmatmul.f32.gmra.mxu0 %v878
    %v1556 = vpop.f32.mrf.mxu0
    %v1557 = vadd.f32 %v1354, %v1556
    %1558 = vmatmul.f32.gmra.mxu0 %v880
    %v1559 = vpop.f32.mrf.mxu0
    %v1560 = vadd.f32 %v1357, %v1559
    %1561 = vmatmul.f32.gmra.mxu0 %v882
    %v1562 = vpop.f32.mrf.mxu0
    %v1563 = vadd.f32 %v1360, %v1562
    %1564 = vmatmul.f32.gmra.mxu0 %v884
    %v1565 = vpop.f32.mrf.mxu0
    %v1566 = vadd.f32 %v1363, %v1565
    %1567 = vdwg.mxu0
    %1568 = vmatpush.msra.mxu0 %v1012
    %1569 = vmatpush.msra.mxu0 %v1008
    %1570 = vmatpush.msra.mxu0 %v1004
    %1571 = vmatpush.msra.mxu0 %v1000
    %1572 = vmatpush.msra.mxu0 %v996
    %1573 = vmatpush.msra.mxu0 %v992
    %1574 = vmatpush.msra.mxu0 %v988
    %1575 = vmatpush.msra.mxu0 %v984
    %1576 = vmatpush.msra.mxu0 %v980
    %1577 = vmatpush.msra.mxu0 %v976
    %1578 = vmatpush.msra.mxu0 %v972
    %1579 = vmatpush.msra.mxu0 %v968
    %1580 = vmatpush.msra.mxu0 %v964
    %1581 = vmatpush.msra.mxu0 %v960
    %1582 = vmatpush.msra.mxu0 %v956
    %1583 = vmatpush.msra.mxu0 %v952
    %1584 = vmatmul.f32.gmra.mxu0 %v879
    %v1585 = vpop.f32.mrf.mxu0
    %v1586 = vadd.f32 %v1557, %v1585
    %1587 = vmatmul.f32.gmra.mxu0 %v881
    %v1588 = vpop.f32.mrf.mxu0
    %v1589 = vadd.f32 %v1560, %v1588
    %1590 = vmatmul.f32.gmra.mxu0 %v883
    %v1591 = vpop.f32.mrf.mxu0
    %v1592 = vadd.f32 %v1563, %v1591
    %1593 = vmatmul.f32.gmra.mxu0 %v885
    %v1594 = vpop.f32.mrf.mxu0
    %v1595 = vadd.f32 %v1566, %v1594
    %1596 = vdwg.mxu0
    %1597 = vmatpush.msra.mxu0 %v949
    %1598 = vmatpush.msra.mxu0 %v945
    %1599 = vmatpush.msra.mxu0 %v941
    %1600 = vmatpush.msra.mxu0 %v937
    %1601 = vmatpush.msra.mxu0 %v933
    %1602 = vmatpush.msra.mxu0 %v929
    %1603 = vmatpush.msra.mxu0 %v925
    %1604 = vmatpush.msra.mxu0 %v921
    %1605 = vmatpush.msra.mxu0 %v917
    %1606 = vmatpush.msra.mxu0 %v913
    %1607 = vmatpush.msra.mxu0 %v909
    %1608 = vmatpush.msra.mxu0 %v905
    %1609 = vmatpush.msra.mxu0 %v901
    %1610 = vmatpush.msra.mxu0 %v897
    %1611 = vmatpush.msra.mxu0 %v893
    %1612 = vmatpush.msra.mxu0 %v889
    %1613 = vmatmul.f32.gmra.mxu0 %v878
    %v1614 = vpop.f32.mrf.mxu0
    %v1615 = vadd.f32 %v1412, %v1614
    %1616 = vmatmul.f32.gmra.mxu0 %v880
    %v1617 = vpop.f32.mrf.mxu0
    %v1618 = vadd.f32 %v1415, %v1617
    %1619 = vmatmul.f32.gmra.mxu0 %v882
    %v1620 = vpop.f32.mrf.mxu0
    %v1621 = vadd.f32 %v1418, %v1620
    %1622 = vmatmul.f32.gmra.mxu0 %v884
    %v1623 = vpop.f32.mrf.mxu0
    %v1624 = vadd.f32 %v1421, %v1623
    %1625 = vdwg.mxu0
    %1626 = vmatpush.msra.mxu0 %v1013
    %1627 = vmatpush.msra.mxu0 %v1009
    %1628 = vmatpush.msra.mxu0 %v1005
    %1629 = vmatpush.msra.mxu0 %v1001
    %1630 = vmatpush.msra.mxu0 %v997
    %1631 = vmatpush.msra.mxu0 %v993
    %1632 = vmatpush.msra.mxu0 %v989
    %1633 = vmatpush.msra.mxu0 %v985
    %1634 = vmatpush.msra.mxu0 %v981
    %1635 = vmatpush.msra.mxu0 %v977
    %1636 = vmatpush.msra.mxu0 %v973
    %1637 = vmatpush.msra.mxu0 %v969
    %1638 = vmatpush.msra.mxu0 %v965
    %1639 = vmatpush.msra.mxu0 %v961
    %1640 = vmatpush.msra.mxu0 %v957
    %1641 = vmatpush.msra.mxu0 %v953
    %1642 = vmatmul.f32.gmra.mxu0 %v879
    %v1643 = vpop.f32.mrf.mxu0
    %v1644 = vadd.f32 %v1615, %v1643
    %1645 = vmatmul.f32.gmra.mxu0 %v881
    %v1646 = vpop.f32.mrf.mxu0
    %v1647 = vadd.f32 %v1618, %v1646
    %1648 = vmatmul.f32.gmra.mxu0 %v883
    %v1649 = vpop.f32.mrf.mxu0
    %v1650 = vadd.f32 %v1621, %v1649
    %1651 = vmatmul.f32.gmra.mxu0 %v885
    %v1652 = vpop.f32.mrf.mxu0
    %v1653 = vadd.f32 %v1624, %v1652
    %1654 = vdwg.mxu0
    %v1655 = vld [vmem:[#allocation3] sm:$0xfc]
    %v1656 = vld [vmem:[#allocation3 + $0x8] sm:$0xfc]
    %v1657 = vld [vmem:[#allocation3 + $0x20] sm:$0x3]
    %v1658 = vld [vmem:[#allocation3 + $0x28] sm:$0x3]
    %v1659 = vld [vmem:[#allocation3 + $0x30] sm:$0xfc]
    %v1660 = vld [vmem:[#allocation3 + $0x38] sm:$0xfc]
    %v1661 = vld [vmem:[#allocation3 + $0x50] sm:$0x3]
    %v1662 = vld [vmem:[#allocation3 + $0x58] sm:$0x3]
    %v1671 = vrot.slane %v1655, 2
    %v1672 = vrot.slane %v880, 2
    %v1673 = vsel %vm593, %v1671, %v1672
    %v1674 = vrot.slane %v1656, 2
    %v1675 = vrot.slane %v881, 2
    %v1676 = vsel %vm593, %v1674, %v1675
    %v1677 = vrot.slane %v1657, 2
    %v1678 = vsel %vm593, %v1672, %v1677
    %v1679 = vrot.slane %v1658, 2
    %v1680 = vsel %vm593, %v1675, %v1679
    %v1681 = vrot.slane %v1659, 2
    %v1682 = vrot.slane %v884, 2
    %v1683 = vsel %vm593, %v1681, %v1682
    %v1684 = vrot.slane %v1660, 2
    %v1685 = vrot.slane %v885, 2
    %v1686 = vsel %vm593, %v1684, %v1685
    %v1687 = vrot.slane %v1661, 2
    %v1688 = vsel %vm593, %v1682, %v1687
    %v1689 = vrot.slane %v1662, 2
    %v1690 = vsel %vm593, %v1685, %v1689
    %s1699 = scalar_lea.vmem [#allocation9], 2048
    %v1700 = vld [vmem:[%s1699] sm:$0xff]
    %v1701 = vld [vmem:[%s1699 + $0x8] sm:$0xff]
    %v1702 = vld [vmem:[%s1699 + $0x10] sm:$0xff]
    %v1703 = vld [vmem:[%s1699 + $0x18] sm:$0xff]
    %v1704 = vld [vmem:[%s1699 + $0x20] sm:$0xff]
    %v1705 = vld [vmem:[%s1699 + $0x28] sm:$0xff]
    %v1706 = vld [vmem:[%s1699 + $0x30] sm:$0xff]
    %v1707 = vld [vmem:[%s1699 + $0x38] sm:$0xff]
    %v1708 = vld [vmem:[%s1699 + $0x40] sm:$0xff]
    %v1709 = vld [vmem:[%s1699 + $0x48] sm:$0xff]
    %v1710 = vld [vmem:[%s1699 + $0x50] sm:$0xff]
    %v1711 = vld [vmem:[%s1699 + $0x58] sm:$0xff]
    %v1712 = vld [vmem:[%s1699 + $0x60] sm:$0xff]
    %v1713 = vld [vmem:[%s1699 + $0x68] sm:$0xff]
    %v1714 = vld [vmem:[%s1699 + $0x70] sm:$0xff]
    %v1715 = vld [vmem:[%s1699 + $0x78] sm:$0xff]
    %v1716 = vld [vmem:[%s1699 + $0x80] sm:$0xff]
    %v1717 = vld [vmem:[%s1699 + $0x88] sm:$0xff]
    %v1718 = vld [vmem:[%s1699 + $0x90] sm:$0xff]
    %v1719 = vld [vmem:[%s1699 + $0x98] sm:$0xff]
    %v1720 = vld [vmem:[%s1699 + $0xa0] sm:$0xff]
    %v1721 = vld [vmem:[%s1699 + $0xa8] sm:$0xff]
    %v1722 = vld [vmem:[%s1699 + $0xb0] sm:$0xff]
    %v1723 = vld [vmem:[%s1699 + $0xb8] sm:$0xff]
    %v1724 = vld [vmem:[%s1699 + $0xc0] sm:$0xff]
    %v1725 = vld [vmem:[%s1699 + $0xc8] sm:$0xff]
    %v1726 = vld [vmem:[%s1699 + $0xd0] sm:$0xff]
    %v1727 = vld [vmem:[%s1699 + $0xd8] sm:$0xff]
    %v1728 = vld [vmem:[%s1699 + $0xe0] sm:$0xff]
    %v1729 = vld [vmem:[%s1699 + $0xe8] sm:$0xff]
    %v1730 = vld [vmem:[%s1699 + $0xf0] sm:$0xff]
    %v1731 = vld [vmem:[%s1699 + $0xf8] sm:$0xff]
    %v1732 = vld [vmem:[%s1699 + $0x100] sm:$0xff]
    %v1733 = vld [vmem:[%s1699 + $0x108] sm:$0xff]
    %v1734 = vld [vmem:[%s1699 + $0x110] sm:$0xff]
    %v1735 = vld [vmem:[%s1699 + $0x118] sm:$0xff]
    %v1736 = vld [vmem:[%s1699 + $0x120] sm:$0xff]
    %v1737 = vld [vmem:[%s1699 + $0x128] sm:$0xff]
    %v1738 = vld [vmem:[%s1699 + $0x130] sm:$0xff]
    %v1739 = vld [vmem:[%s1699 + $0x138] sm:$0xff]
    %v1740 = vld [vmem:[%s1699 + $0x140] sm:$0xff]
    %v1741 = vld [vmem:[%s1699 + $0x148] sm:$0xff]
    %v1742 = vld [vmem:[%s1699 + $0x150] sm:$0xff]
    %v1743 = vld [vmem:[%s1699 + $0x158] sm:$0xff]
    %v1744 = vld [vmem:[%s1699 + $0x160] sm:$0xff]
    %v1745 = vld [vmem:[%s1699 + $0x168] sm:$0xff]
    %v1746 = vld [vmem:[%s1699 + $0x170] sm:$0xff]
    %v1747 = vld [vmem:[%s1699 + $0x178] sm:$0xff]
    %v1748 = vld [vmem:[%s1699 + $0x180] sm:$0xff]
    %v1749 = vld [vmem:[%s1699 + $0x188] sm:$0xff]
    %v1750 = vld [vmem:[%s1699 + $0x190] sm:$0xff]
    %v1751 = vld [vmem:[%s1699 + $0x198] sm:$0xff]
    %v1752 = vld [vmem:[%s1699 + $0x1a0] sm:$0xff]
    %v1753 = vld [vmem:[%s1699 + $0x1a8] sm:$0xff]
    %v1754 = vld [vmem:[%s1699 + $0x1b0] sm:$0xff]
    %v1755 = vld [vmem:[%s1699 + $0x1b8] sm:$0xff]
    %v1756 = vld [vmem:[%s1699 + $0x1c0] sm:$0xff]
    %v1757 = vld [vmem:[%s1699 + $0x1c8] sm:$0xff]
    %v1758 = vld [vmem:[%s1699 + $0x1d0] sm:$0xff]
    %v1759 = vld [vmem:[%s1699 + $0x1d8] sm:$0xff]
    %v1760 = vld [vmem:[%s1699 + $0x1e0] sm:$0xff]
    %v1761 = vld [vmem:[%s1699 + $0x1e8] sm:$0xff]
    %v1762 = vld [vmem:[%s1699 + $0x1f0] sm:$0xff]
    %v1763 = vld [vmem:[%s1699 + $0x1f8] sm:$0xff]
    %v1764 = vld [vmem:[%s1699 + $0x200] sm:$0xff]
    %v1765 = vld [vmem:[%s1699 + $0x208] sm:$0xff]
    %v1766 = vld [vmem:[%s1699 + $0x210] sm:$0xff]
    %v1767 = vld [vmem:[%s1699 + $0x218] sm:$0xff]
    %v1768 = vld [vmem:[%s1699 + $0x220] sm:$0xff]
    %v1769 = vld [vmem:[%s1699 + $0x228] sm:$0xff]
    %v1770 = vld [vmem:[%s1699 + $0x230] sm:$0xff]
    %v1771 = vld [vmem:[%s1699 + $0x238] sm:$0xff]
    %v1772 = vld [vmem:[%s1699 + $0x240] sm:$0xff]
    %v1773 = vld [vmem:[%s1699 + $0x248] sm:$0xff]
    %v1774 = vld [vmem:[%s1699 + $0x250] sm:$0xff]
    %v1775 = vld [vmem:[%s1699 + $0x258] sm:$0xff]
    %v1776 = vld [vmem:[%s1699 + $0x260] sm:$0xff]
    %v1777 = vld [vmem:[%s1699 + $0x268] sm:$0xff]
    %v1778 = vld [vmem:[%s1699 + $0x270] sm:$0xff]
    %v1779 = vld [vmem:[%s1699 + $0x278] sm:$0xff]
    %v1780 = vld [vmem:[%s1699 + $0x280] sm:$0xff]
    %v1781 = vld [vmem:[%s1699 + $0x288] sm:$0xff]
    %v1782 = vld [vmem:[%s1699 + $0x290] sm:$0xff]
    %v1783 = vld [vmem:[%s1699 + $0x298] sm:$0xff]
    %v1784 = vld [vmem:[%s1699 + $0x2a0] sm:$0xff]
    %v1785 = vld [vmem:[%s1699 + $0x2a8] sm:$0xff]
    %v1786 = vld [vmem:[%s1699 + $0x2b0] sm:$0xff]
    %v1787 = vld [vmem:[%s1699 + $0x2b8] sm:$0xff]
    %v1788 = vld [vmem:[%s1699 + $0x2c0] sm:$0xff]
    %v1789 = vld [vmem:[%s1699 + $0x2c8] sm:$0xff]
    %v1790 = vld [vmem:[%s1699 + $0x2d0] sm:$0xff]
    %v1791 = vld [vmem:[%s1699 + $0x2d8] sm:$0xff]
    %v1792 = vld [vmem:[%s1699 + $0x2e0] sm:$0xff]
    %v1793 = vld [vmem:[%s1699 + $0x2e8] sm:$0xff]
    %v1794 = vld [vmem:[%s1699 + $0x2f0] sm:$0xff]
    %v1795 = vld [vmem:[%s1699 + $0x2f8] sm:$0xff]
    %v1796 = vld [vmem:[%s1699 + $0x300] sm:$0xff]
    %v1797 = vld [vmem:[%s1699 + $0x308] sm:$0xff]
    %v1798 = vld [vmem:[%s1699 + $0x310] sm:$0xff]
    %v1799 = vld [vmem:[%s1699 + $0x318] sm:$0xff]
    %v1800 = vld [vmem:[%s1699 + $0x320] sm:$0xff]
    %v1801 = vld [vmem:[%s1699 + $0x328] sm:$0xff]
    %v1802 = vld [vmem:[%s1699 + $0x330] sm:$0xff]
    %v1803 = vld [vmem:[%s1699 + $0x338] sm:$0xff]
    %v1804 = vld [vmem:[%s1699 + $0x340] sm:$0xff]
    %v1805 = vld [vmem:[%s1699 + $0x348] sm:$0xff]
    %v1806 = vld [vmem:[%s1699 + $0x350] sm:$0xff]
    %v1807 = vld [vmem:[%s1699 + $0x358] sm:$0xff]
    %v1808 = vld [vmem:[%s1699 + $0x360] sm:$0xff]
    %v1809 = vld [vmem:[%s1699 + $0x368] sm:$0xff]
    %v1810 = vld [vmem:[%s1699 + $0x370] sm:$0xff]
    %v1811 = vld [vmem:[%s1699 + $0x378] sm:$0xff]
    %v1812 = vld [vmem:[%s1699 + $0x380] sm:$0xff]
    %v1813 = vld [vmem:[%s1699 + $0x388] sm:$0xff]
    %v1814 = vld [vmem:[%s1699 + $0x390] sm:$0xff]
    %v1815 = vld [vmem:[%s1699 + $0x398] sm:$0xff]
    %v1816 = vld [vmem:[%s1699 + $0x3a0] sm:$0xff]
    %v1817 = vld [vmem:[%s1699 + $0x3a8] sm:$0xff]
    %v1818 = vld [vmem:[%s1699 + $0x3b0] sm:$0xff]
    %v1819 = vld [vmem:[%s1699 + $0x3b8] sm:$0xff]
    %v1820 = vld [vmem:[%s1699 + $0x3c0] sm:$0xff]
    %v1821 = vld [vmem:[%s1699 + $0x3c8] sm:$0xff]
    %v1822 = vld [vmem:[%s1699 + $0x3d0] sm:$0xff]
    %v1823 = vld [vmem:[%s1699 + $0x3d8] sm:$0xff]
    %v1824 = vld [vmem:[%s1699 + $0x3e0] sm:$0xff]
    %v1825 = vld [vmem:[%s1699 + $0x3e8] sm:$0xff]
    %v1826 = vld [vmem:[%s1699 + $0x3f0] sm:$0xff]
    %v1827 = vld [vmem:[%s1699 + $0x3f8] sm:$0xff]
    %1828 = vmatpush.msra.mxu0 %v1760
    %1829 = vmatpush.msra.mxu0 %v1756
    %1830 = vmatpush.msra.mxu0 %v1752
    %1831 = vmatpush.msra.mxu0 %v1748
    %1832 = vmatpush.msra.mxu0 %v1744
    %1833 = vmatpush.msra.mxu0 %v1740
    %1834 = vmatpush.msra.mxu0 %v1736
    %1835 = vmatpush.msra.mxu0 %v1732
    %1836 = vmatpush.msra.mxu0 %v1728
    %1837 = vmatpush.msra.mxu0 %v1724
    %1838 = vmatpush.msra.mxu0 %v1720
    %1839 = vmatpush.msra.mxu0 %v1716
    %1840 = vmatpush.msra.mxu0 %v1712
    %1841 = vmatpush.msra.mxu0 %v1708
    %1842 = vmatpush.msra.mxu0 %v1704
    %1843 = vmatpush.msra.mxu0 %v1700
    %1844 = vmatmul.f32.gmra.mxu0 %v1673
    %v1845 = vpop.f32.mrf.mxu0
    %v1846 = vadd.f32 0.0, %v1845
    %1847 = vmatmul.f32.gmra.mxu0 %v1678
    %v1848 = vpop.f32.mrf.mxu0
    %v1849 = vadd.f32 0.0, %v1848
    %1850 = vmatmul.f32.gmra.mxu0 %v1683
    %v1851 = vpop.f32.mrf.mxu0
    %v1852 = vadd.f32 0.0, %v1851
    %1853 = vmatmul.f32.gmra.mxu0 %v1688
    %v1854 = vpop.f32.mrf.mxu0
    %v1855 = vadd.f32 0.0, %v1854
    %1856 = vdwg.mxu0
    %1857 = vmatpush.msra.mxu0 %v1824
    %1858 = vmatpush.msra.mxu0 %v1820
    %1859 = vmatpush.msra.mxu0 %v1816
    %1860 = vmatpush.msra.mxu0 %v1812
    %1861 = vmatpush.msra.mxu0 %v1808
    %1862 = vmatpush.msra.mxu0 %v1804
    %1863 = vmatpush.msra.mxu0 %v1800
    %1864 = vmatpush.msra.mxu0 %v1796
    %1865 = vmatpush.msra.mxu0 %v1792
    %1866 = vmatpush.msra.mxu0 %v1788
    %1867 = vmatpush.msra.mxu0 %v1784
    %1868 = vmatpush.msra.mxu0 %v1780
    %1869 = vmatpush.msra.mxu0 %v1776
    %1870 = vmatpush.msra.mxu0 %v1772
    %1871 = vmatpush.msra.mxu0 %v1768
    %1872 = vmatpush.msra.mxu0 %v1764
    %1873 = vmatmul.f32.gmra.mxu0 %v1676
    %v1874 = vpop.f32.mrf.mxu0
    %v1875 = vadd.f32 %v1846, %v1874
    %1876 = vmatmul.f32.gmra.mxu0 %v1680
    %v1877 = vpop.f32.mrf.mxu0
    %v1878 = vadd.f32 %v1849, %v1877
    %1879 = vmatmul.f32.gmra.mxu0 %v1686
    %v1880 = vpop.f32.mrf.mxu0
    %v1881 = vadd.f32 %v1852, %v1880
    %1882 = vmatmul.f32.gmra.mxu0 %v1690
    %v1883 = vpop.f32.mrf.mxu0
    %v1884 = vadd.f32 %v1855, %v1883
    %1885 = vdwg.mxu0
    %1886 = vmatpush.msra.mxu0 %v1761
    %1887 = vmatpush.msra.mxu0 %v1757
    %1888 = vmatpush.msra.mxu0 %v1753
    %1889 = vmatpush.msra.mxu0 %v1749
    %1890 = vmatpush.msra.mxu0 %v1745
    %1891 = vmatpush.msra.mxu0 %v1741
    %1892 = vmatpush.msra.mxu0 %v1737
    %1893 = vmatpush.msra.mxu0 %v1733
    %1894 = vmatpush.msra.mxu0 %v1729
    %1895 = vmatpush.msra.mxu0 %v1725
    %1896 = vmatpush.msra.mxu0 %v1721
    %1897 = vmatpush.msra.mxu0 %v1717
    %1898 = vmatpush.msra.mxu0 %v1713
    %1899 = vmatpush.msra.mxu0 %v1709
    %1900 = vmatpush.msra.mxu0 %v1705
    %1901 = vmatpush.msra.mxu0 %v1701
    %1902 = vmatmul.f32.gmra.mxu0 %v1673
    %v1903 = vpop.f32.mrf.mxu0
    %v1904 = vadd.f32 0.0, %v1903
    %1905 = vmatmul.f32.gmra.mxu0 %v1678
    %v1906 = vpop.f32.mrf.mxu0
    %v1907 = vadd.f32 0.0, %v1906
    %1908 = vmatmul.f32.gmra.mxu0 %v1683
    %v1909 = vpop.f32.mrf.mxu0
    %v1910 = vadd.f32 0.0, %v1909
    %1911 = vmatmul.f32.gmra.mxu0 %v1688
    %v1912 = vpop.f32.mrf.mxu0
    %v1913 = vadd.f32 0.0, %v1912
    %1914 = vdwg.mxu0
    %1915 = vmatpush.msra.mxu0 %v1825
    %1916 = vmatpush.msra.mxu0 %v1821
    %1917 = vmatpush.msra.mxu0 %v1817
    %1918 = vmatpush.msra.mxu0 %v1813
    %1919 = vmatpush.msra.mxu0 %v1809
    %1920 = vmatpush.msra.mxu0 %v1805
    %1921 = vmatpush.msra.mxu0 %v1801
    %1922 = vmatpush.msra.mxu0 %v1797
    %1923 = vmatpush.msra.mxu0 %v1793
    %1924 = vmatpush.msra.mxu0 %v1789
    %1925 = vmatpush.msra.mxu0 %v1785
    %1926 = vmatpush.msra.mxu0 %v1781
    %1927 = vmatpush.msra.mxu0 %v1777
    %1928 = vmatpush.msra.mxu0 %v1773
    %1929 = vmatpush.msra.mxu0 %v1769
    %1930 = vmatpush.msra.mxu0 %v1765
    %1931 = vmatmul.f32.gmra.mxu0 %v1676
    %v1932 = vpop.f32.mrf.mxu0
    %v1933 = vadd.f32 %v1904, %v1932
    %1934 = vmatmul.f32.gmra.mxu0 %v1680
    %v1935 = vpop.f32.mrf.mxu0
    %v1936 = vadd.f32 %v1907, %v1935
    %1937 = vmatmul.f32.gmra.mxu0 %v1686
    %v1938 = vpop.f32.mrf.mxu0
    %v1939 = vadd.f32 %v1910, %v1938
    %1940 = vmatmul.f32.gmra.mxu0 %v1690
    %v1941 = vpop.f32.mrf.mxu0
    %v1942 = vadd.f32 %v1913, %v1941
    %1943 = vdwg.mxu0
    %1944 = vmatpush.msra.mxu0 %v1762
    %1945 = vmatpush.msra.mxu0 %v1758
    %1946 = vmatpush.msra.mxu0 %v1754
    %1947 = vmatpush.msra.mxu0 %v1750
    %1948 = vmatpush.msra.mxu0 %v1746
    %1949 = vmatpush.msra.mxu0 %v1742
    %1950 = vmatpush.msra.mxu0 %v1738
    %1951 = vmatpush.msra.mxu0 %v1734
    %1952 = vmatpush.msra.mxu0 %v1730
    %1953 = vmatpush.msra.mxu0 %v1726
    %1954 = vmatpush.msra.mxu0 %v1722
    %1955 = vmatpush.msra.mxu0 %v1718
    %1956 = vmatpush.msra.mxu0 %v1714
    %1957 = vmatpush.msra.mxu0 %v1710
    %1958 = vmatpush.msra.mxu0 %v1706
    %1959 = vmatpush.msra.mxu0 %v1702
    %1960 = vmatmul.f32.gmra.mxu0 %v1673
    %v1961 = vpop.f32.mrf.mxu0
    %v1962 = vadd.f32 0.0, %v1961
    %1963 = vmatmul.f32.gmra.mxu0 %v1678
    %v1964 = vpop.f32.mrf.mxu0
    %v1965 = vadd.f32 0.0, %v1964
    %1966 = vmatmul.f32.gmra.mxu0 %v1683
    %v1967 = vpop.f32.mrf.mxu0
    %v1968 = vadd.f32 0.0, %v1967
    %1969 = vmatmul.f32.gmra.mxu0 %v1688
    %v1970 = vpop.f32.mrf.mxu0
    %v1971 = vadd.f32 0.0, %v1970
    %1972 = vdwg.mxu0
    %1973 = vmatpush.msra.mxu0 %v1826
    %1974 = vmatpush.msra.mxu0 %v1822
    %1975 = vmatpush.msra.mxu0 %v1818
    %1976 = vmatpush.msra.mxu0 %v1814
    %1977 = vmatpush.msra.mxu0 %v1810
    %1978 = vmatpush.msra.mxu0 %v1806
    %1979 = vmatpush.msra.mxu0 %v1802
    %1980 = vmatpush.msra.mxu0 %v1798
    %1981 = vmatpush.msra.mxu0 %v1794
    %1982 = vmatpush.msra.mxu0 %v1790
    %1983 = vmatpush.msra.mxu0 %v1786
    %1984 = vmatpush.msra.mxu0 %v1782
    %1985 = vmatpush.msra.mxu0 %v1778
    %1986 = vmatpush.msra.mxu0 %v1774
    %1987 = vmatpush.msra.mxu0 %v1770
    %1988 = vmatpush.msra.mxu0 %v1766
    %1989 = vmatmul.f32.gmra.mxu0 %v1676
    %v1990 = vpop.f32.mrf.mxu0
    %v1991 = vadd.f32 %v1962, %v1990
    %1992 = vmatmul.f32.gmra.mxu0 %v1680
    %v1993 = vpop.f32.mrf.mxu0
    %v1994 = vadd.f32 %v1965, %v1993
    %1995 = vmatmul.f32.gmra.mxu0 %v1686
    %v1996 = vpop.f32.mrf.mxu0
    %v1997 = vadd.f32 %v1968, %v1996
    %1998 = vmatmul.f32.gmra.mxu0 %v1690
    %v1999 = vpop.f32.mrf.mxu0
    %v2000 = vadd.f32 %v1971, %v1999
    %2001 = vdwg.mxu0
    %2002 = vmatpush.msra.mxu0 %v1763
    %2003 = vmatpush.msra.mxu0 %v1759
    %2004 = vmatpush.msra.mxu0 %v1755
    %2005 = vmatpush.msra.mxu0 %v1751
    %2006 = vmatpush.msra.mxu0 %v1747
    %2007 = vmatpush.msra.mxu0 %v1743
    %2008 = vmatpush.msra.mxu0 %v1739
    %2009 = vmatpush.msra.mxu0 %v1735
    %2010 = vmatpush.msra.mxu0 %v1731
    %2011 = vmatpush.msra.mxu0 %v1727
    %2012 = vmatpush.msra.mxu0 %v1723
    %2013 = vmatpush.msra.mxu0 %v1719
    %2014 = vmatpush.msra.mxu0 %v1715
    %2015 = vmatpush.msra.mxu0 %v1711
    %2016 = vmatpush.msra.mxu0 %v1707
    %2017 = vmatpush.msra.mxu0 %v1703
    %2018 = vmatmul.f32.gmra.mxu0 %v1673
    %v2019 = vpop.f32.mrf.mxu0
    %v2020 = vadd.f32 0.0, %v2019
    %2021 = vmatmul.f32.gmra.mxu0 %v1678
    %v2022 = vpop.f32.mrf.mxu0
    %v2023 = vadd.f32 0.0, %v2022
    %2024 = vmatmul.f32.gmra.mxu0 %v1683
    %v2025 = vpop.f32.mrf.mxu0
    %v2026 = vadd.f32 0.0, %v2025
    %2027 = vmatmul.f32.gmra.mxu0 %v1688
    %v2028 = vpop.f32.mrf.mxu0
    %v2029 = vadd.f32 0.0, %v2028
    %2030 = vdwg.mxu0
    %2031 = vmatpush.msra.mxu0 %v1827
    %2032 = vmatpush.msra.mxu0 %v1823
    %2033 = vmatpush.msra.mxu0 %v1819
    %2034 = vmatpush.msra.mxu0 %v1815
    %2035 = vmatpush.msra.mxu0 %v1811
    %2036 = vmatpush.msra.mxu0 %v1807
    %2037 = vmatpush.msra.mxu0 %v1803
    %2038 = vmatpush.msra.mxu0 %v1799
    %2039 = vmatpush.msra.mxu0 %v1795
    %2040 = vmatpush.msra.mxu0 %v1791
    %2041 = vmatpush.msra.mxu0 %v1787
    %2042 = vmatpush.msra.mxu0 %v1783
    %2043 = vmatpush.msra.mxu0 %v1779
    %2044 = vmatpush.msra.mxu0 %v1775
    %2045 = vmatpush.msra.mxu0 %v1771
    %2046 = vmatpush.msra.mxu0 %v1767
    %2047 = vmatmul.f32.gmra.mxu0 %v1676
    %v2048 = vpop.f32.mrf.mxu0
    %v2049 = vadd.f32 %v2020, %v2048
    %2050 = vmatmul.f32.gmra.mxu0 %v1680
    %v2051 = vpop.f32.mrf.mxu0
    %v2052 = vadd.f32 %v2023, %v2051
    %2053 = vmatmul.f32.gmra.mxu0 %v1686
    %v2054 = vpop.f32.mrf.mxu0
    %v2055 = vadd.f32 %v2026, %v2054
    %2056 = vmatmul.f32.gmra.mxu0 %v1690
    %v2057 = vpop.f32.mrf.mxu0
    %v2058 = vadd.f32 %v2029, %v2057
    %2059 = vdwg.mxu0
    %v2060 = vadd.f32 %v1470, %v1875
    %v2061 = vadd.f32 %v1528, %v1933
    %v2062 = vadd.f32 %v1586, %v1991
    %v2063 = vadd.f32 %v1644, %v2049
    %v2064 = vadd.f32 %v1473, %v1878
    %v2065 = vadd.f32 %v1531, %v1936
    %v2066 = vadd.f32 %v1589, %v1994
    %v2067 = vadd.f32 %v1647, %v2052
    %v2068 = vadd.f32 %v1476, %v1881
    %v2069 = vadd.f32 %v1534, %v1939
    %v2070 = vadd.f32 %v1592, %v1997
    %v2071 = vadd.f32 %v1650, %v2055
    %v2072 = vadd.f32 %v1479, %v1884
    %v2073 = vadd.f32 %v1537, %v1942
    %v2074 = vadd.f32 %v1595, %v2000
    %v2075 = vadd.f32 %v1653, %v2058
    %v2076 = vld [vmem:[#allocation10] sm:$0xf]
    %v2078 = vperm.slane %v2076, 0
    %v2079 = vperm.slane %v2076, 1
    %v2080 = vperm.slane %v2076, 2
    %v2081 = vperm.slane %v2076, 3
    %v2086 = vadd.f32 %v2060, %v2078
    %v2087 = vadd.f32 %v2061, %v2079
    %v2088 = vadd.f32 %v2062, %v2080
    %v2089 = vadd.f32 %v2063, %v2081
    %v2090 = vadd.f32 %v2064, %v2078
    %v2091 = vadd.f32 %v2065, %v2079
    %v2092 = vadd.f32 %v2066, %v2080
    %v2093 = vadd.f32 %v2067, %v2081
    %v2094 = vadd.f32 %v2068, %v2078
    %v2095 = vadd.f32 %v2069, %v2079
    %v2096 = vadd.f32 %v2070, %v2080
    %v2097 = vadd.f32 %v2071, %v2081
    %v2098 = vadd.f32 %v2072, %v2078
    %v2099 = vadd.f32 %v2073, %v2079
    %v2100 = vadd.f32 %v2074, %v2080
    %v2101 = vadd.f32 %v2075, %v2081
    %v2102 = vmax.f32 %v2086, 0.0
    %v2103 = vmax.f32 %v2087, 0.0
    %v2104 = vmax.f32 %v2088, 0.0
    %v2105 = vmax.f32 %v2089, 0.0
    %v2106 = vmax.f32 %v2090, 0.0
    %v2107 = vmax.f32 %v2091, 0.0
    %v2108 = vmax.f32 %v2092, 0.0
    %v2109 = vmax.f32 %v2093, 0.0
    %v2110 = vmax.f32 %v2094, 0.0
    %v2111 = vmax.f32 %v2095, 0.0
    %v2112 = vmax.f32 %v2096, 0.0
    %v2113 = vmax.f32 %v2097, 0.0
    %v2114 = vmax.f32 %v2098, 0.0
    %v2115 = vmax.f32 %v2099, 0.0
    %v2116 = vmax.f32 %v2100, 0.0
    %v2117 = vmax.f32 %v2101, 0.0
    %v2118 = vrot.slane %v2102, 4
    %v2119 = vadd.f32 %v2102, %v2118
    %v2120 = vrot.slane %v2119, 2
    %v2121 = vadd.f32 %v2119, %v2120
    %v2122 = vrot.slane %v2121, 1
    %v2123 = vadd.f32 %v2121, %v2122
    %v2124 = vrot.slane %v2103, 4
    %v2125 = vadd.f32 %v2103, %v2124
    %v2126 = vrot.slane %v2125, 2
    %v2127 = vadd.f32 %v2125, %v2126
    %v2128 = vrot.slane %v2127, 1
    %v2129 = vadd.f32 %v2127, %v2128
    %v2130 = vrot.slane %v2104, 4
    %v2131 = vadd.f32 %v2104, %v2130
    %v2132 = vrot.slane %v2131, 2
    %v2133 = vadd.f32 %v2131, %v2132
    %v2134 = vrot.slane %v2133, 1
    %v2135 = vadd.f32 %v2133, %v2134
    %v2136 = vrot.slane %v2105, 4
    %v2137 = vadd.f32 %v2105, %v2136
    %v2138 = vrot.slane %v2137, 2
    %v2139 = vadd.f32 %v2137, %v2138
    %v2140 = vrot.slane %v2139, 1
    %v2141 = vadd.f32 %v2139, %v2140
    %v2142 = vrot.slane %v2110, 4
    %v2143 = vadd.f32 %v2110, %v2142
    %v2144 = vrot.slane %v2143, 2
    %v2145 = vadd.f32 %v2143, %v2144
    %v2146 = vrot.slane %v2145, 1
    %v2147 = vadd.f32 %v2145, %v2146
    %v2148 = vrot.slane %v2111, 4
    %v2149 = vadd.f32 %v2111, %v2148
    %v2150 = vrot.slane %v2149, 2
    %v2151 = vadd.f32 %v2149, %v2150
    %v2152 = vrot.slane %v2151, 1
    %v2153 = vadd.f32 %v2151, %v2152
    %v2154 = vrot.slane %v2112, 4
    %v2155 = vadd.f32 %v2112, %v2154
    %v2156 = vrot.slane %v2155, 2
    %v2157 = vadd.f32 %v2155, %v2156
    %v2158 = vrot.slane %v2157, 1
    %v2159 = vadd.f32 %v2157, %v2158
    %v2160 = vrot.slane %v2113, 4
    %v2161 = vadd.f32 %v2113, %v2160
    %v2162 = vrot.slane %v2161, 2
    %v2163 = vadd.f32 %v2161, %v2162
    %v2164 = vrot.slane %v2163, 1
    %v2165 = vadd.f32 %v2163, %v2164
    %v2166 = vrot.slane %v2106, 4
    %v2167 = vadd.f32 %v2106, %v2166
    %v2168 = vrot.slane %v2167, 2
    %v2169 = vadd.f32 %v2167, %v2168
    %v2170 = vrot.slane %v2169, 1
    %v2171 = vadd.f32 %v2169, %v2170
    %v2172 = vrot.slane %v2107, 4
    %v2173 = vadd.f32 %v2107, %v2172
    %v2174 = vrot.slane %v2173, 2
    %v2175 = vadd.f32 %v2173, %v2174
    %v2176 = vrot.slane %v2175, 1
    %v2177 = vadd.f32 %v2175, %v2176
    %v2178 = vrot.slane %v2108, 4
    %v2179 = vadd.f32 %v2108, %v2178
    %v2180 = vrot.slane %v2179, 2
    %v2181 = vadd.f32 %v2179, %v2180
    %v2182 = vrot.slane %v2181, 1
    %v2183 = vadd.f32 %v2181, %v2182
    %v2184 = vrot.slane %v2109, 4
    %v2185 = vadd.f32 %v2109, %v2184
    %v2186 = vrot.slane %v2185, 2
    %v2187 = vadd.f32 %v2185, %v2186
    %v2188 = vrot.slane %v2187, 1
    %v2189 = vadd.f32 %v2187, %v2188
    %v2190 = vrot.slane %v2114, 4
    %v2191 = vadd.f32 %v2114, %v2190
    %v2192 = vrot.slane %v2191, 2
    %v2193 = vadd.f32 %v2191, %v2192
    %v2194 = vrot.slane %v2193, 1
    %v2195 = vadd.f32 %v2193, %v2194
    %v2196 = vrot.slane %v2115, 4
    %v2197 = vadd.f32 %v2115, %v2196
    %v2198 = vrot.slane %v2197, 2
    %v2199 = vadd.f32 %v2197, %v2198
    %v2200 = vrot.slane %v2199, 1
    %v2201 = vadd.f32 %v2199, %v2200
    %v2202 = vrot.slane %v2116, 4
    %v2203 = vadd.f32 %v2116, %v2202
    %v2204 = vrot.slane %v2203, 2
    %v2205 = vadd.f32 %v2203, %v2204
    %v2206 = vrot.slane %v2205, 1
    %v2207 = vadd.f32 %v2205, %v2206
    %v2208 = vrot.slane %v2117, 4
    %v2209 = vadd.f32 %v2117, %v2208
    %v2210 = vrot.slane %v2209, 2
    %v2211 = vadd.f32 %v2209, %v2210
    %v2212 = vrot.slane %v2211, 1
    %v2213 = vadd.f32 %v2211, %v2212
    %v2214 = vld [vmem:[%s5] sm:$0xff]
    %v2215 = vld [vmem:[%s5 + $0x8] sm:$0xff]
    %v2216 = vld [vmem:[%s5 + $0x10] sm:$0xff]
    %v2217 = vld [vmem:[%s5 + $0x18] sm:$0xff]
    %v2218 = vld [vmem:[%s5 + $0x20] sm:$0xff]
    %v2219 = vld [vmem:[%s5 + $0x28] sm:$0xff]
    %v2220 = vld [vmem:[%s5 + $0x30] sm:$0xff]
    %v2221 = vld [vmem:[%s5 + $0x38] sm:$0xff]
    %v2222 = vld [vmem:[%s5 + $0x40] sm:$0xff]
    %v2223 = vld [vmem:[%s5 + $0x48] sm:$0xff]
    %v2224 = vld [vmem:[%s5 + $0x50] sm:$0xff]
    %v2225 = vld [vmem:[%s5 + $0x58] sm:$0xff]
    %v2226 = vld [vmem:[%s5 + $0x60] sm:$0xff]
    %v2227 = vld [vmem:[%s5 + $0x68] sm:$0xff]
    %v2228 = vld [vmem:[%s5 + $0x70] sm:$0xff]
    %v2229 = vld [vmem:[%s5 + $0x78] sm:$0xff]
    %v2230 = vld [vmem:[%s5 + $0x80] sm:$0xff]
    %v2231 = vld [vmem:[%s5 + $0x88] sm:$0xff]
    %v2232 = vld [vmem:[%s5 + $0x90] sm:$0xff]
    %v2233 = vld [vmem:[%s5 + $0x98] sm:$0xff]
    %v2234 = vld [vmem:[%s5 + $0xa0] sm:$0xff]
    %v2235 = vld [vmem:[%s5 + $0xa8] sm:$0xff]
    %v2236 = vld [vmem:[%s5 + $0xb0] sm:$0xff]
    %v2237 = vld [vmem:[%s5 + $0xb8] sm:$0xff]
    %v2238 = vld [vmem:[%s5 + $0xc0] sm:$0xff]
    %v2239 = vld [vmem:[%s5 + $0xc8] sm:$0xff]
    %v2240 = vld [vmem:[%s5 + $0xd0] sm:$0xff]
    %v2241 = vld [vmem:[%s5 + $0xd8] sm:$0xff]
    %v2242 = vld [vmem:[%s5 + $0xe0] sm:$0xff]
    %v2243 = vld [vmem:[%s5 + $0xe8] sm:$0xff]
    %v2244 = vld [vmem:[%s5 + $0xf0] sm:$0xff]
    %v2245 = vld [vmem:[%s5 + $0xf8] sm:$0xff]
    %v2246 = vld [vmem:[%s5 + $0x100] sm:$0xff]
    %v2247 = vld [vmem:[%s5 + $0x108] sm:$0xff]
    %v2248 = vld [vmem:[%s5 + $0x110] sm:$0xff]
    %v2249 = vld [vmem:[%s5 + $0x118] sm:$0xff]
    %v2250 = vld [vmem:[%s5 + $0x120] sm:$0xff]
    %v2251 = vld [vmem:[%s5 + $0x128] sm:$0xff]
    %v2252 = vld [vmem:[%s5 + $0x130] sm:$0xff]
    %v2253 = vld [vmem:[%s5 + $0x138] sm:$0xff]
    %v2254 = vld [vmem:[%s5 + $0x140] sm:$0xff]
    %v2255 = vld [vmem:[%s5 + $0x148] sm:$0xff]
    %v2256 = vld [vmem:[%s5 + $0x150] sm:$0xff]
    %v2257 = vld [vmem:[%s5 + $0x158] sm:$0xff]
    %v2258 = vld [vmem:[%s5 + $0x160] sm:$0xff]
    %v2259 = vld [vmem:[%s5 + $0x168] sm:$0xff]
    %v2260 = vld [vmem:[%s5 + $0x170] sm:$0xff]
    %v2261 = vld [vmem:[%s5 + $0x178] sm:$0xff]
    %v2262 = vld [vmem:[%s5 + $0x180] sm:$0xff]
    %v2263 = vld [vmem:[%s5 + $0x188] sm:$0xff]
    %v2264 = vld [vmem:[%s5 + $0x190] sm:$0xff]
    %v2265 = vld [vmem:[%s5 + $0x198] sm:$0xff]
    %v2266 = vld [vmem:[%s5 + $0x1a0] sm:$0xff]
    %v2267 = vld [vmem:[%s5 + $0x1a8] sm:$0xff]
    %v2268 = vld [vmem:[%s5 + $0x1b0] sm:$0xff]
    %v2269 = vld [vmem:[%s5 + $0x1b8] sm:$0xff]
    %v2270 = vld [vmem:[%s5 + $0x1c0] sm:$0xff]
    %v2271 = vld [vmem:[%s5 + $0x1c8] sm:$0xff]
    %v2272 = vld [vmem:[%s5 + $0x1d0] sm:$0xff]
    %v2273 = vld [vmem:[%s5 + $0x1d8] sm:$0xff]
    %v2274 = vld [vmem:[%s5 + $0x1e0] sm:$0xff]
    %v2275 = vld [vmem:[%s5 + $0x1e8] sm:$0xff]
    %v2276 = vld [vmem:[%s5 + $0x1f0] sm:$0xff]
    %v2277 = vld [vmem:[%s5 + $0x1f8] sm:$0xff]
    %s2278 = scalar_lea.vmem %s5, 512
    %v2279 = vld [vmem:[%s2278] sm:$0xff]
    %v2280 = vld [vmem:[%s2278 + $0x8] sm:$0xff]
    %v2281 = vld [vmem:[%s2278 + $0x10] sm:$0xff]
    %v2282 = vld [vmem:[%s2278 + $0x18] sm:$0xff]
    %v2283 = vld [vmem:[%s2278 + $0x20] sm:$0xff]
    %v2284 = vld [vmem:[%s2278 + $0x28] sm:$0xff]
    %v2285 = vld [vmem:[%s2278 + $0x30] sm:$0xff]
    %v2286 = vld [vmem:[%s2278 + $0x38] sm:$0xff]
    %v2287 = vld [vmem:[%s2278 + $0x40] sm:$0xff]
    %v2288 = vld [vmem:[%s2278 + $0x48] sm:$0xff]
    %v2289 = vld [vmem:[%s2278 + $0x50] sm:$0xff]
    %v2290 = vld [vmem:[%s2278 + $0x58] sm:$0xff]
    %v2291 = vld [vmem:[%s2278 + $0x60] sm:$0xff]
    %v2292 = vld [vmem:[%s2278 + $0x68] sm:$0xff]
    %v2293 = vld [vmem:[%s2278 + $0x70] sm:$0xff]
    %v2294 = vld [vmem:[%s2278 + $0x78] sm:$0xff]
    %v2295 = vld [vmem:[%s2278 + $0x80] sm:$0xff]
    %v2296 = vld [vmem:[%s2278 + $0x88] sm:$0xff]
    %v2297 = vld [vmem:[%s2278 + $0x90] sm:$0xff]
    %v2298 = vld [vmem:[%s2278 + $0x98] sm:$0xff]
    %v2299 = vld [vmem:[%s2278 + $0xa0] sm:$0xff]
    %v2300 = vld [vmem:[%s2278 + $0xa8] sm:$0xff]
    %v2301 = vld [vmem:[%s2278 + $0xb0] sm:$0xff]
    %v2302 = vld [vmem:[%s2278 + $0xb8] sm:$0xff]
    %v2303 = vld [vmem:[%s2278 + $0xc0] sm:$0xff]
    %v2304 = vld [vmem:[%s2278 + $0xc8] sm:$0xff]
    %v2305 = vld [vmem:[%s2278 + $0xd0] sm:$0xff]
    %v2306 = vld [vmem:[%s2278 + $0xd8] sm:$0xff]
    %v2307 = vld [vmem:[%s2278 + $0xe0] sm:$0xff]
    %v2308 = vld [vmem:[%s2278 + $0xe8] sm:$0xff]
    %v2309 = vld [vmem:[%s2278 + $0xf0] sm:$0xff]
    %v2310 = vld [vmem:[%s2278 + $0xf8] sm:$0xff]
    %v2311 = vld [vmem:[%s2278 + $0x100] sm:$0xff]
    %v2312 = vld [vmem:[%s2278 + $0x108] sm:$0xff]
    %v2313 = vld [vmem:[%s2278 + $0x110] sm:$0xff]
    %v2314 = vld [vmem:[%s2278 + $0x118] sm:$0xff]
    %v2315 = vld [vmem:[%s2278 + $0x120] sm:$0xff]
    %v2316 = vld [vmem:[%s2278 + $0x128] sm:$0xff]
    %v2317 = vld [vmem:[%s2278 + $0x130] sm:$0xff]
    %v2318 = vld [vmem:[%s2278 + $0x138] sm:$0xff]
    %v2319 = vld [vmem:[%s2278 + $0x140] sm:$0xff]
    %v2320 = vld [vmem:[%s2278 + $0x148] sm:$0xff]
    %v2321 = vld [vmem:[%s2278 + $0x150] sm:$0xff]
    %v2322 = vld [vmem:[%s2278 + $0x158] sm:$0xff]
    %v2323 = vld [vmem:[%s2278 + $0x160] sm:$0xff]
    %v2324 = vld [vmem:[%s2278 + $0x168] sm:$0xff]
    %v2325 = vld [vmem:[%s2278 + $0x170] sm:$0xff]
    %v2326 = vld [vmem:[%s2278 + $0x178] sm:$0xff]
    %v2327 = vld [vmem:[%s2278 + $0x180] sm:$0xff]
    %v2328 = vld [vmem:[%s2278 + $0x188] sm:$0xff]
    %v2329 = vld [vmem:[%s2278 + $0x190] sm:$0xff]
    %v2330 = vld [vmem:[%s2278 + $0x198] sm:$0xff]
    %v2331 = vld [vmem:[%s2278 + $0x1a0] sm:$0xff]
    %v2332 = vld [vmem:[%s2278 + $0x1a8] sm:$0xff]
    %v2333 = vld [vmem:[%s2278 + $0x1b0] sm:$0xff]
    %v2334 = vld [vmem:[%s2278 + $0x1b8] sm:$0xff]
    %v2335 = vld [vmem:[%s2278 + $0x1c0] sm:$0xff]
    %v2336 = vld [vmem:[%s2278 + $0x1c8] sm:$0xff]
    %v2337 = vld [vmem:[%s2278 + $0x1d0] sm:$0xff]
    %v2338 = vld [vmem:[%s2278 + $0x1d8] sm:$0xff]
    %v2339 = vld [vmem:[%s2278 + $0x1e0] sm:$0xff]
    %v2340 = vld [vmem:[%s2278 + $0x1e8] sm:$0xff]
    %v2341 = vld [vmem:[%s2278 + $0x1f0] sm:$0xff]
    %v2342 = vld [vmem:[%s2278 + $0x1f8] sm:$0xff]
    %vm2351 = vcmask 1041409
    %v2352 = vsel %vm2351, %v2195, %v2171
    %v2353 = vsel %vm2351, %v2201, %v2177
    %v2354 = vsel %vm2351, %v2207, %v2183
    %v2355 = vsel %vm2351, %v2213, %v2189
    %2360 = vmatpush.msra.mxu0 %v2294
    %2361 = vmatpush.msra.mxu0 %v2293
    %2362 = vmatpush.msra.mxu0 %v2292
    %2363 = vmatpush.msra.mxu0 %v2291
    %2364 = vmatpush.msra.mxu0 %v2290
    %2365 = vmatpush.msra.mxu0 %v2289
    %2366 = vmatpush.msra.mxu0 %v2288
    %2367 = vmatpush.msra.mxu0 %v2287
    %2368 = vmatpush.msra.mxu0 %v2286
    %2369 = vmatpush.msra.mxu0 %v2285
    %2370 = vmatpush.msra.mxu0 %v2284
    %2371 = vmatpush.msra.mxu0 %v2283
    %2372 = vmatpush.msra.mxu0 %v2282
    %2373 = vmatpush.msra.mxu0 %v2281
    %2374 = vmatpush.msra.mxu0 %v2280
    %2375 = vmatpush.msra.mxu0 %v2279
    %2376 = vmatmul.f32.gmra.mxu0 %v2352
    %v2377 = vpop.f32.mrf.mxu0
    %v2378 = vadd.f32 0.0, %v2377
    %2379 = vdwg.mxu0
    %2380 = vmatpush.msra.mxu0 %v2310
    %2381 = vmatpush.msra.mxu0 %v2309
    %2382 = vmatpush.msra.mxu0 %v2308
    %2383 = vmatpush.msra.mxu0 %v2307
    %2384 = vmatpush.msra.mxu0 %v2306
    %2385 = vmatpush.msra.mxu0 %v2305
    %2386 = vmatpush.msra.mxu0 %v2304
    %2387 = vmatpush.msra.mxu0 %v2303
    %2388 = vmatpush.msra.mxu0 %v2302
    %2389 = vmatpush.msra.mxu0 %v2301
    %2390 = vmatpush.msra.mxu0 %v2300
    %2391 = vmatpush.msra.mxu0 %v2299
    %2392 = vmatpush.msra.mxu0 %v2298
    %2393 = vmatpush.msra.mxu0 %v2297
    %2394 = vmatpush.msra.mxu0 %v2296
    %2395 = vmatpush.msra.mxu0 %v2295
    %2396 = vmatmul.f32.gmra.mxu0 %v2353
    %v2397 = vpop.f32.mrf.mxu0
    %v2398 = vadd.f32 %v2378, %v2397
    %2399 = vdwg.mxu0
    %2400 = vmatpush.msra.mxu0 %v2326
    %2401 = vmatpush.msra.mxu0 %v2325
    %2402 = vmatpush.msra.mxu0 %v2324
    %2403 = vmatpush.msra.mxu0 %v2323
    %2404 = vmatpush.msra.mxu0 %v2322
    %2405 = vmatpush.msra.mxu0 %v2321
    %2406 = vmatpush.msra.mxu0 %v2320
    %2407 = vmatpush.msra.mxu0 %v2319
    %2408 = vmatpush.msra.mxu0 %v2318
    %2409 = vmatpush.msra.mxu0 %v2317
    %2410 = vmatpush.msra.mxu0 %v2316
    %2411 = vmatpush.msra.mxu0 %v2315
    %2412 = vmatpush.msra.mxu0 %v2314
    %2413 = vmatpush.msra.mxu0 %v2313
    %2414 = vmatpush.msra.mxu0 %v2312
    %2415 = vmatpush.msra.mxu0 %v2311
    %2416 = vmatmul.f32.gmra.mxu0 %v2354
    %v2417 = vpop.f32.mrf.mxu0
    %v2418 = vadd.f32 %v2398, %v2417
    %2419 = vdwg.mxu0
    %2420 = vmatpush.msra.mxu0 %v2342
    %2421 = vmatpush.msra.mxu0 %v2341
    %2422 = vmatpush.msra.mxu0 %v2340
    %2423 = vmatpush.msra.mxu0 %v2339
    %2424 = vmatpush.msra.mxu0 %v2338
    %2425 = vmatpush.msra.mxu0 %v2337
    %2426 = vmatpush.msra.mxu0 %v2336
    %2427 = vmatpush.msra.mxu0 %v2335
    %2428 = vmatpush.msra.mxu0 %v2334
    %2429 = vmatpush.msra.mxu0 %v2333
    %2430 = vmatpush.msra.mxu0 %v2332
    %2431 = vmatpush.msra.mxu0 %v2331
    %2432 = vmatpush.msra.mxu0 %v2330
    %2433 = vmatpush.msra.mxu0 %v2329
    %2434 = vmatpush.msra.mxu0 %v2328
    %2435 = vmatpush.msra.mxu0 %v2327
    %2436 = vmatmul.f32.gmra.mxu0 %v2355
    %v2437 = vpop.f32.mrf.mxu0
    %v2438 = vadd.f32 %v2418, %v2437
    %2439 = vdwg.mxu0
    %v2448 = vsel %vm2351, %v2147, %v2123
    %v2449 = vsel %vm2351, %v2153, %v2129
    %v2450 = vsel %vm2351, %v2159, %v2135
    %v2451 = vsel %vm2351, %v2165, %v2141
    %2456 = vmatpush.msra.mxu0 %v2229
    %2457 = vmatpush.msra.mxu0 %v2228
    %2458 = vmatpush.msra.mxu0 %v2227
    %2459 = vmatpush.msra.mxu0 %v2226
    %2460 = vmatpush.msra.mxu0 %v2225
    %2461 = vmatpush.msra.mxu0 %v2224
    %2462 = vmatpush.msra.mxu0 %v2223
    %2463 = vmatpush.msra.mxu0 %v2222
    %2464 = vmatpush.msra.mxu0 %v2221
    %2465 = vmatpush.msra.mxu0 %v2220
    %2466 = vmatpush.msra.mxu0 %v2219
    %2467 = vmatpush.msra.mxu0 %v2218
    %2468 = vmatpush.msra.mxu0 %v2217
    %2469 = vmatpush.msra.mxu0 %v2216
    %2470 = vmatpush.msra.mxu0 %v2215
    %2471 = vmatpush.msra.mxu0 %v2214
    %2472 = vmatmul.f32.gmra.mxu0 %v2448
    %v2473 = vpop.f32.mrf.mxu0
    %v2474 = vadd.f32 %v2438, %v2473
    %2475 = vdwg.mxu0
    %2476 = vmatpush.msra.mxu0 %v2245
    %2477 = vmatpush.msra.mxu0 %v2244
    %2478 = vmatpush.msra.mxu0 %v2243
    %2479 = vmatpush.msra.mxu0 %v2242
    %2480 = vmatpush.msra.mxu0 %v2241
    %2481 = vmatpush.msra.mxu0 %v2240
    %2482 = vmatpush.msra.mxu0 %v2239
    %2483 = vmatpush.msra.mxu0 %v2238
    %2484 = vmatpush.msra.mxu0 %v2237
    %2485 = vmatpush.msra.mxu0 %v2236
    %2486 = vmatpush.msra.mxu0 %v2235
    %2487 = vmatpush.msra.mxu0 %v2234
    %2488 = vmatpush.msra.mxu0 %v2233
    %2489 = vmatpush.msra.mxu0 %v2232
    %2490 = vmatpush.msra.mxu0 %v2231
    %2491 = vmatpush.msra.mxu0 %v2230
    %2492 = vmatmul.f32.gmra.mxu0 %v2449
    %v2493 = vpop.f32.mrf.mxu0
    %v2494 = vadd.f32 %v2474, %v2493
    %2495 = vdwg.mxu0
    %2496 = vmatpush.msra.mxu0 %v2261
    %2497 = vmatpush.msra.mxu0 %v2260
    %2498 = vmatpush.msra.mxu0 %v2259
    %2499 = vmatpush.msra.mxu0 %v2258
    %2500 = vmatpush.msra.mxu0 %v2257
    %2501 = vmatpush.msra.mxu0 %v2256
    %2502 = vmatpush.msra.mxu0 %v2255
    %2503 = vmatpush.msra.mxu0 %v2254
    %2504 = vmatpush.msra.mxu0 %v2253
    %2505 = vmatpush.msra.mxu0 %v2252
    %2506 = vmatpush.msra.mxu0 %v2251
    %2507 = vmatpush.msra.mxu0 %v2250
    %2508 = vmatpush.msra.mxu0 %v2249
    %2509 = vmatpush.msra.mxu0 %v2248
    %2510 = vmatpush.msra.mxu0 %v2247
    %2511 = vmatpush.msra.mxu0 %v2246
    %2512 = vmatmul.f32.gmra.mxu0 %v2450
    %v2513 = vpop.f32.mrf.mxu0
    %v2514 = vadd.f32 %v2494, %v2513
    %2515 = vdwg.mxu0
    %2516 = vmatpush.msra.mxu0 %v2277
    %2517 = vmatpush.msra.mxu0 %v2276
    %2518 = vmatpush.msra.mxu0 %v2275
    %2519 = vmatpush.msra.mxu0 %v2274
    %2520 = vmatpush.msra.mxu0 %v2273
    %2521 = vmatpush.msra.mxu0 %v2272
    %2522 = vmatpush.msra.mxu0 %v2271
    %2523 = vmatpush.msra.mxu0 %v2270
    %2524 = vmatpush.msra.mxu0 %v2269
    %2525 = vmatpush.msra.mxu0 %v2268
    %2526 = vmatpush.msra.mxu0 %v2267
    %2527 = vmatpush.msra.mxu0 %v2266
    %2528 = vmatpush.msra.mxu0 %v2265
    %2529 = vmatpush.msra.mxu0 %v2264
    %2530 = vmatpush.msra.mxu0 %v2263
    %2531 = vmatpush.msra.mxu0 %v2262
    %2532 = vmatmul.f32.gmra.mxu0 %v2451
    %v2533 = vpop.f32.mrf.mxu0
    %v2534 = vadd.f32 %v2514, %v2533
    %2535 = vdwg.mxu0
    %v2536 = vld [vmem:[#allocation12] sm:$0x1]
    %v2538 = vperm.slane %v2536, 0
    %v2540 = vadd.f32 %v2534, %v2538
    %v2541 = vmax.f32 %v2540, 0.0
    %v2542 = vld [vmem:[%s7] sm:$0xff]
    %v2543 = vld [vmem:[%s7 + $0x8] sm:$0xff]
    %v2544 = vld [vmem:[%s7 + $0x10] sm:$0xff]
    %v2545 = vld [vmem:[%s7 + $0x18] sm:$0xff]
    %v2546 = vld [vmem:[#allocation4] sm:$0x1]
    %v2548 = vperm.slane %v2546, 0
    %vm2550 = vcmask 261120
    %v2552 = vsel %vm2550, %v2541, 0
    %2554 = vmatpush.msra.mxu0 0.0
    %2555 = vmatpush.msra.mxu0 0.0
    %2556 = vmatpush.msra.mxu0 0.0
    %2557 = vmatpush.msra.mxu0 0.0
    %2558 = vmatpush.msra.mxu0 0.0
    %2559 = vmatpush.msra.mxu0 0.0
    %2560 = vmatpush.msra.mxu0 0.0
    %2561 = vmatpush.msra.mxu0 0.0
    %2562 = vmatpush.msra.mxu0 0.0
    %2563 = vmatpush.msra.mxu0 0.0
    %2564 = vmatpush.msra.mxu0 0.0
    %2565 = vmatpush.msra.mxu0 0.0
    %2566 = vmatpush.msra.mxu0 %v2545
    %2567 = vmatpush.msra.mxu0 %v2544
    %2568 = vmatpush.msra.mxu0 %v2543
    %2569 = vmatpush.msra.mxu0 %v2542
    %2570 = vmatmul.f32.gmra.mxu0 %v2552
    %v2571 = vpop.f32.mrf.mxu0
    %v2572 = vadd.f32 %v2548, %v2571
    %2573 = vdwg.mxu0
    %vm2574 = vcmask 1024
    %2575 = vst.msk [vmem:[%s9] sm:$0x3] %vm2574, %v2572
    // Predicated region
    $region58: #{cnn_model_forward.1} parent=1 // pred_check
      _
    $region59: #{cnn_model_forward.1} parent=1 // pred_check_branch
      %2577 = sbr.rel (0) target = $region61
    $region60: #{cnn_model_forward.1} parent=1 // pred_region
      _
    $region61: #{cnn_model_forward.1} parent=1 // pred_fallthru
      _
    // Predicated region
    $region62: #{cnn_model_forward.1} parent=1 // pred_check
      _
    $region63: #{cnn_model_forward.1} parent=1 // pred_check_branch
      %2579 = sbr.rel (0) target = $region65
    $region64: #{cnn_model_forward.1} parent=1 // pred_region
      _
    $region65: #{cnn_model_forward.1} parent=1 // pred_fallthru
      _
    %2580 = vsyncpa [#allocation6], 1
    %2581 = vsyncpa [#allocation8], 1
    %2582 = vsyncpa [#allocation11], 1

</llo_original>
